<compile_context>
chip_gen: v5e
topology: v5e:2x2
jax: 0.10.0
libtpu: 0.0.40
codegen_flags: <defaults>
</compile_context>

<pallas_src>
import math
import functools

import numpy as np
import jax
import jax.numpy as jnp
from jax import lax
from jax.experimental import pallas as pl
from jax.experimental.pallas import tpu as pltpu

NEG_INF = -1e30  # additive mask value; exp() underflows to exactly 0 (like -inf fill)


# --------------------------------------------------------------------------
# Pallas kernel: one DecoderLayer for one batch element
# --------------------------------------------------------------------------

def _decoder_layer_kernel(n_head, self_mask_mode, *refs):
    """self_mask_mode: "causal" (mask generated in-kernel), "dense" (extra
    (T,T) additive mask ref), or "none"."""
    if self_mask_mode == "dense":
        (x_ref, enc_ref, dkpm_ref, ekpm_ref, amask_ref,
         wq_ref, wk_ref, wv_ref, bq_ref, bk_ref, bv_ref, wo3_ref, bo_ref,
         fw1_ref, fb1_ref, fw2_ref, fb2_ref, g_ref, b_ref,
         out_ref, selfw_ref, crossw_ref) = refs
    else:
        (x_ref, enc_ref, dkpm_ref, ekpm_ref,
         wq_ref, wk_ref, wv_ref, bq_ref, bk_ref, bv_ref, wo3_ref, bo_ref,
         fw1_ref, fb1_ref, fw2_ref, fb2_ref, g_ref, b_ref,
         out_ref, selfw_ref, crossw_ref) = refs
        amask_ref = None

    T = x_ref.shape[1]
    D = x_ref.shape[2]
    hd = D // n_head
    scale = 1.0 / math.sqrt(hd)

    x16 = x_ref[0]                      # (T, D) bf16
    enc16 = enc_ref[0]                  # (S, D) bf16
    dkpm = dkpm_ref[0]                  # (1, T) f32 additive key-padding mask
    ekpm = ekpm_ref[0]                  # (1, S) f32 additive key-padding mask

    # Combined additive self-attention mask, built ONCE (hoisted out of the
    # attention math).  Causal pattern is generated in-kernel -> no (T,T) DMA.
    if self_mask_mode == "causal":
        row = lax.broadcasted_iota(jnp.int32, (T, T), 0)
        col = lax.broadcasted_iota(jnp.int32, (T, T), 1)
        causal = jnp.where(col <= row, 0.0, NEG_INF).astype(jnp.float32)
        mask_self = causal + dkpm                      # (T, T)
    elif self_mask_mode == "dense":
        mask_self = amask_ref[...] + dkpm              # (T, T)
    else:
        mask_self = dkpm                               # (1, T), broadcasts over rows
    mask_cross = ekpm                                  # (1, S)

    def split_heads(t):                                # (L, D) f32 -> (H, L, hd) bf16
        parts = [t[:, h * hd:(h + 1) * hd] for h in range(n_head)]
        return jnp.stack(parts, axis=0).astype(jnp.bfloat16)

    def mha(q_src16, kv_src16, add_mask):
        # Full-width projections (good MXU contraction/output width), f32 accum.
        q = jnp.dot(q_src16, wq_ref[...], preferred_element_type=jnp.float32) + bq_ref[...]
        k = jnp.dot(kv_src16, wk_ref[...], preferred_element_type=jnp.float32) + bk_ref[...]
        v = jnp.dot(kv_src16, wv_ref[...], preferred_element_type=jnp.float32) + bv_ref[...]
        qh = split_heads(q * scale)                    # scale folded into Q once
        kh = split_heads(k)
        vh = split_heads(v)

        # One head-batched matmul for all heads (no unrolled per-head loop).
        s = jnp.einsum('hqd,hkd->hqk', qh, kh,
                       preferred_element_type=jnp.float32)     # (H, Lq, Lk) f32
        s = s + add_mask[None]                                  # mask added once
        m = jnp.max(s, axis=-1, keepdims=True)
        p = jnp.exp(s - m)
        denom = jnp.sum(p, axis=-1, keepdims=True)
        w = p * pl.reciprocal(denom, approx=True)               # EUP reciprocal
        # TODO(synk): attention-weight dropout (training mode) applied as identity.
        avg_w = jnp.sum(w, axis=0) * (1.0 / n_head)             # head-averaged weights

        ctx = jnp.einsum('hqk,hkd->hqd', w.astype(jnp.bfloat16), vh,
                         preferred_element_type=jnp.float32)    # (H, Lq, hd)
        # Output projection accumulated per head via per-head-reshaped Wo:
        # no concat scratch, result produced/stored at full lane width.
        proj = jnp.einsum('hqd,hde->hqe', ctx.astype(jnp.bfloat16), wo3_ref[...],
                          preferred_element_type=jnp.float32)   # (H, Lq, D)
        return jnp.sum(proj, axis=0) + bo_ref[...], avg_w

    # Self-attention (causal + dec key-padding), then cross-attention with the
    # SAME projection weights (reference reuses self.attn).
    self_out, self_w = mha(x16, x16, mask_self)                          # (T, D)
    cross_out, cross_w = mha(self_out.astype(jnp.bfloat16), enc16, mask_cross)

    # FeedForward: x + dropout(W2 relu(W1 x)), then LayerNorm.
    h1 = jnp.maximum(
        jnp.dot(cross_out.astype(jnp.bfloat16), fw1_ref[...],
                preferred_element_type=jnp.float32) + fb1_ref[...], 0.0)
    ff = jnp.dot(h1.astype(jnp.bfloat16), fw2_ref[...],
                 preferred_element_type=jnp.float32) + fb2_ref[...]
    # TODO(synk): FeedForward nn.Dropout (training mode) applied as identity.
    y = cross_out + ff
    mu = jnp.mean(y, axis=-1, keepdims=True)
    var = jnp.mean((y - mu) ** 2, axis=-1, keepdims=True)
    yn = (y - mu) * lax.rsqrt(var + 1e-5)

    out_ref[0] = (yn * g_ref[...] + b_ref[...]).astype(out_ref.dtype)
    selfw_ref[0] = self_w
    crossw_ref[0] = cross_w


# --------------------------------------------------------------------------
# pallas_call wrapper
# --------------------------------------------------------------------------

def _prepare_kernel_params(params, n_head):
    """bf16 cast of matmul operands (halves weight DMA), per-head reshape of Wo.
    Biases and LayerNorm affine stay f32 (added post f32 accumulation)."""
    D = params["wq_t"].shape[0]
    hd = D // n_head
    bf = jnp.bfloat16
    return {
        "wq_t": params["wq_t"].astype(bf),
        "wk_t": params["wk_t"].astype(bf),
        "wv_t": params["wv_t"].astype(bf),
        "bq": params["bq"], "bk": params["bk"], "bv": params["bv"],
        "wo3": params["wo_t"].reshape(n_head, hd, D).astype(bf),
        "bo": params["bo"],
        "fw1_t": params["fw1_t"].astype(bf), "fb1": params["fb1"],
        "fw2_t": params["fw2_t"].astype(bf), "fb2": params["fb2"],
        "ln_g": params["ln_g"], "ln_b": params["ln_b"],
    }


def decoder_layer_forward(x_tbd, enc_sbd, params, n_head,
                          dec_attn_mask="causal",
                          enc_padding_mask=None, dec_padding_mask=None):
    """x_tbd: (T, B, D), enc_sbd: (S, B, D) seq-first like nn.MultiheadAttention.
    dec_attn_mask: "causal" (generated in-kernel), a (T,T) bool/float mask, or None.
    *_padding_mask: (B, L) bool, True = ignore key (PyTorch convention), or None.
    Returns (output (T,B,D), self_attention (B,T,T), context_attention (B,T,S))."""
    T, B, D = x_tbd.shape
    S = enc_sbd.shape[0]

    x_btd = jnp.transpose(x_tbd, (1, 0, 2)).astype(jnp.bfloat16)
    enc_btd = jnp.transpose(enc_sbd, (1, 0, 2)).astype(jnp.bfloat16)

    def kpm_to_additive(mask, L):
        if mask is None:
            return jnp.zeros((B, 1, L), jnp.float32)
        return jnp.where(mask, NEG_INF, 0.0).astype(jnp.float32).reshape(B, 1, L)

    dkpm = kpm_to_additive(dec_padding_mask, T)
    ekpm = kpm_to_additive(enc_padding_mask, S)

    if isinstance(dec_attn_mask, str):
        assert dec_attn_mask == "causal"
        mode, mask_args, mask_specs = "causal", (), ()
    elif dec_attn_mask is None:
        mode, mask_args, mask_specs = "none", (), ()
    else:
        mode = "dense"
        am = dec_attn_mask
        if am.dtype == jnp.bool_:
            am = jnp.where(am, NEG_INF, 0.0)
        mask_args = (am.astype(jnp.float32),)
        mask_specs = (pl.BlockSpec((T, T), lambda b: (0, 0)),)

    kp = _prepare_kernel_params(params, n_head)
    hd = D // n_head
    d_ff = kp["fw1_t"].shape[1]

    def rep(shape):  # replicated weight block (constant index map -> stays resident)
        if len(shape) == 2:
            return pl.BlockSpec(shape, lambda b: (0, 0))
        return pl.BlockSpec(shape, lambda b: (0, 0, 0))

    in_specs = [
        pl.BlockSpec((1, T, D), lambda b: (b, 0, 0)),   # x (bf16)
        pl.BlockSpec((1, S, D), lambda b: (b, 0, 0)),   # enc_outputs (bf16)
        pl.BlockSpec((1, 1, T), lambda b: (b, 0, 0)),   # dec key-padding (additive f32)
        pl.BlockSpec((1, 1, S), lambda b: (b, 0, 0)),   # enc key-padding (additive f32)
        *mask_specs,                                    # optional dense attn_mask
        rep((D, D)), rep((D, D)), rep((D, D)),          # Wq^T, Wk^T, Wv^T (bf16)
        rep((1, D)), rep((1, D)), rep((1, D)),          # bq, bk, bv (f32)
        rep((n_head, hd, D)), rep((1, D)),              # Wo per-head (bf16), bo
        rep((D, d_ff)), rep((1, d_ff)),                 # ff W1^T, b1
        rep((d_ff, D)), rep((1, D)),                    # ff W2^T, b2
        rep((1, D)), rep((1, D)),                       # LayerNorm gamma, beta
    ]
    out_shapes = (
        jax.ShapeDtypeStruct((B, T, D), jnp.float32),
        jax.ShapeDtypeStruct((B, T, T), jnp.float32),
        jax.ShapeDtypeStruct((B, T, S), jnp.float32),
    )
    out_specs = (
        pl.BlockSpec((1, T, D), lambda b: (b, 0, 0)),
        pl.BlockSpec((1, T, T), lambda b: (b, 0, 0)),
        pl.BlockSpec((1, T, S), lambda b: (b, 0, 0)),
    )

    out_btd, self_w, cross_w = pl.pallas_call(
        functools.partial(_decoder_layer_kernel, n_head, mode),
        out_shape=out_shapes,
        grid=(B,),                                      # B >= 2 -> both v7x cores busy
        in_specs=in_specs,
        out_specs=out_specs,
        compiler_params=pltpu.CompilerParams(dimension_semantics=("parallel",)),
    )(x_btd, enc_btd, dkpm, ekpm, *mask_args,
      kp["wq_t"], kp["wk_t"], kp["wv_t"], kp["bq"], kp["bk"], kp["bv"],
      kp["wo3"], kp["bo"], kp["fw1_t"], kp["fb1"], kp["fw2_t"], kp["fb2"],
      kp["ln_g"], kp["ln_b"])

    return jnp.transpose(out_btd, (1, 0, 2)), self_w, cross_w


# --------------------------------------------------------------------------
# Pure-JAX f32 reference (numerical sanity check of the kernel)
# --------------------------------------------------------------------------

def _ref_mha(q_in, kv_in, p, n_head, attn_mask_add, kpm_add):
    B, Lq, D = q_in.shape
    Lk = kv_in.shape[1]
    hd = D // n_head
    hp = "highest"
    q = jnp.einsum("bld,de->ble", q_in, p["wq_t"], precision=hp) + p["bq"]
    k = jnp.einsum("bld,de->ble", kv_in, p["wk_t"], precision=hp) + p["bk"]
    v = jnp.einsum("bld,de->ble", kv_in, p["wv_t"], precision=hp) + p["bv"]
    q = q.reshape(B, Lq, n_head, hd).transpose(0, 2, 1, 3) * (1.0 / math.sqrt(hd))
    k = k.reshape(B, Lk, n_head, hd).transpose(0, 2, 1, 3)
    v = v.reshape(B, Lk, n_head, hd).transpose(0, 2, 1, 3)
    s = jnp.einsum("bhqd,bhkd->bhqk", q, k, precision=hp)
    s = s + kpm_add[:, None, None, :]
    if attn_mask_add is not None:
        s = s + attn_mask_add[None, None, :, :]
    w = jax.nn.softmax(s, axis=-1)
    o = jnp.einsum("bhqk,bhkd->bhqd", w, v, precision=hp)
    o = o.transpose(0, 2, 1, 3).reshape(B, Lq, D)
    o = jnp.einsum("bld,de->ble", o, p["wo_t"], precision=hp) + p["bo"]
    return o, w.mean(axis=1)


def decoder_layer_ref(x_tbd, enc_sbd, params, n_head, dec_attn_mask_add,
                      enc_padding_mask, dec_padding_mask):
    hp = "highest"
    x = jnp.transpose(x_tbd, (1, 0, 2))
    enc = jnp.transpose(enc_sbd, (1, 0, 2))
    B, T, _ = x.shape
    S = enc.shape[1]
    dkpm = (jnp.where(dec_padding_mask, NEG_INF, 0.0).astype(jnp.float32)
            if dec_padding_mask is not None else jnp.zeros((B, T), jnp.float32))
    ekpm = (jnp.where(enc_padding_mask, NEG_INF, 0.0).astype(jnp.float32)
            if enc_padding_mask is not None else jnp.zeros((B, S), jnp.float32))
    self_out, self_w = _ref_mha(x, x, params, n_head, dec_attn_mask_add, dkpm)
    cross_out, cross_w = _ref_mha(self_out, enc, params, n_head, None, ekpm)
    h = jax.nn.relu(jnp.einsum("bld,df->blf", cross_out, params["fw1_t"],
                               precision=hp) + params["fb1"])
    ff = jnp.einsum("blf,fd->bld", h, params["fw2_t"], precision=hp) + params["fb2"]
    y = cross_out + ff
    mu = y.mean(-1, keepdims=True)
    var = ((y - mu) ** 2).mean(-1, keepdims=True)
    out = (y - mu) / jnp.sqrt(var + 1e-5) * params["ln_g"] + params["ln_b"]
    return jnp.transpose(out, (1, 0, 2)), self_w, cross_w


# --------------------------------------------------------------------------
# Deterministic parameter init (shapes from the module's __init__)
# --------------------------------------------------------------------------

def _xavier(key, shape, gain=1.0):
    fan_in, fan_out = shape[0], shape[1]     # stored pre-transposed: (in, out)
    a = gain * math.sqrt(6.0 / (fan_in + fan_out))
    return jax.random.uniform(key, shape, jnp.float32, -a, a)


def init_params(key, d_model, n_head, d_ff):
    ks = jax.random.split(key, 11)
    relu_gain = math.sqrt(2.0)
    return {
        "wq_t": _xavier(ks[0], (d_model, d_model)),
        "wk_t": _xavier(ks[1], (d_model, d_model)),
        "wv_t": _xavier(ks[2], (d_model, d_model)),
        "bq": jax.random.uniform(ks[3], (1, d_model), jnp.float32, -0.05, 0.05),
        "bk": jax.random.uniform(ks[4], (1, d_model), jnp.float32, -0.05, 0.05),
        "bv": jax.random.uniform(ks[5], (1, d_model), jnp.float32, -0.05, 0.05),
        "wo_t": _xavier(ks[6], (d_model, d_model)),
        "bo": jnp.zeros((1, d_model), jnp.float32),
        "fw1_t": _xavier(ks[7], (d_model, d_ff), relu_gain),     # Linear(d_model, d_ff, relu init)
        "fb1": jax.random.uniform(ks[8], (1, d_ff), jnp.float32, -0.05, 0.05),
        "fw2_t": _xavier(ks[9], (d_ff, d_model)),                # Linear(d_ff, d_model)
        "fb2": jax.random.uniform(ks[10], (1, d_model), jnp.float32, -0.05, 0.05),
        "ln_g": jnp.ones((1, d_model), jnp.float32),             # LayerNorm(d_model)
        "ln_b": jnp.zeros((1, d_model), jnp.float32),
    }


# --------------------------------------------------------------------------

if __name__ == "__main__":
    T, B, S = 8, 2, 8                     # decoder length, batch, encoder length
    d_model, n_head, d_ff = 32, 4, 64

    key = jax.random.PRNGKey(0)
    kx, ke, kp = jax.random.split(key, 3)

    x = jax.random.normal(kx, (T, B, d_model), jnp.float32)            # seq-first
    enc_outputs = jax.random.normal(ke, (S, B, d_model), jnp.float32)  # seq-first
    dec_padding_mask = jnp.zeros((B, T), bool).at[0, T - 1].set(True)
    enc_padding_mask = jnp.zeros((B, S), bool).at[1, S - 1].set(True)
    causal_add = jnp.where(jnp.triu(jnp.ones((T, T), bool), k=1),
                           NEG_INF, 0.0).astype(jnp.float32)

    params = init_params(kp, d_model, n_head, d_ff)

    # In-kernel causal-mask path (typical Transformer-TTS decoder usage).
    out, self_w, cross_w = decoder_layer_forward(
        x, enc_outputs, params, n_head, dec_attn_mask="causal",
        enc_padding_mask=enc_padding_mask, dec_padding_mask=dec_padding_mask)
    jax.block_until_ready(out)
    jax.block_until_ready(self_w)
    jax.block_until_ready(cross_w)

    # Dense attn_mask path (general (T,T) float mask) must match the causal path.
    out_d, self_w_d, cross_w_d = decoder_layer_forward(
        x, enc_outputs, params, n_head, dec_attn_mask=causal_add,
        enc_padding_mask=enc_padding_mask, dec_padding_mask=dec_padding_mask)
    np.testing.assert_allclose(np.asarray(out), np.asarray(out_d), rtol=1e-5, atol=1e-5)
    np.testing.assert_allclose(np.asarray(self_w), np.asarray(self_w_d), rtol=1e-5, atol=1e-5)
    np.testing.assert_allclose(np.asarray(cross_w), np.asarray(cross_w_d), rtol=1e-5, atol=1e-5)

    # Numerical check vs. a pure-JAX float32 reference of the module's math
    # (kernel uses bf16 MXU operands with f32 accumulation).
    ref_out, ref_sw, ref_cw = decoder_layer_ref(
        x, enc_outputs, params, n_head, causal_add,
        enc_padding_mask, dec_padding_mask)
    np.testing.assert_allclose(np.asarray(out), np.asarray(ref_out), rtol=5e-2, atol=5e-2)
    np.testing.assert_allclose(np.asarray(self_w), np.asarray(ref_sw), rtol=5e-2, atol=5e-2)
    np.testing.assert_allclose(np.asarray(cross_w), np.asarray(ref_cw), rtol=5e-2, atol=5e-2)

    assert out.shape == (T, B, d_model)
    assert self_w.shape == (B, T, T)
    assert cross_w.shape == (B, T, S)
    print("KERNEL_OK")
</pallas_src>

<mosaic_0001>
module attributes {stable_mosaic.version = 11 : i64} {
  func.func @_decoder_layer_kernel(%arg0: i32, %arg1: memref<1x8x32xbf16, #tpu.memory_space<vmem>>, %arg2: memref<1x8x32xbf16, #tpu.memory_space<vmem>>, %arg3: memref<1x1x8xf32, #tpu.memory_space<vmem>>, %arg4: memref<1x1x8xf32, #tpu.memory_space<vmem>>, %arg5: memref<32x32xbf16, #tpu.memory_space<vmem>>, %arg6: memref<32x32xbf16, #tpu.memory_space<vmem>>, %arg7: memref<32x32xbf16, #tpu.memory_space<vmem>>, %arg8: memref<1x32xf32, #tpu.memory_space<vmem>>, %arg9: memref<1x32xf32, #tpu.memory_space<vmem>>, %arg10: memref<1x32xf32, #tpu.memory_space<vmem>>, %arg11: memref<4x8x32xbf16, #tpu.memory_space<vmem>>, %arg12: memref<1x32xf32, #tpu.memory_space<vmem>>, %arg13: memref<32x64xbf16, #tpu.memory_space<vmem>>, %arg14: memref<1x64xf32, #tpu.memory_space<vmem>>, %arg15: memref<64x32xbf16, #tpu.memory_space<vmem>>, %arg16: memref<1x32xf32, #tpu.memory_space<vmem>>, %arg17: memref<1x32xf32, #tpu.memory_space<vmem>>, %arg18: memref<1x32xf32, #tpu.memory_space<vmem>>, %arg19: memref<1x8x32xf32, #tpu.memory_space<vmem>>, %arg20: memref<1x8x8xf32, #tpu.memory_space<vmem>>, %arg21: memref<1x8x8xf32, #tpu.memory_space<vmem>>) attributes {dimension_semantics = [#tpu.dimension_semantics<parallel>], iteration_bounds = array<i64: 2>, scalar_prefetch = 0 : i64, scratch_operands = 0 : i64, tpu.core_type = #tpu.core_type<tc>, window_params = [{transform_indices = @transform_0, window_bounds = array<i64: 1, 8, 32>}, {transform_indices = @transform_1, window_bounds = array<i64: 1, 8, 32>}, {transform_indices = @transform_2, window_bounds = array<i64: 1, 1, 8>}, {transform_indices = @transform_3, window_bounds = array<i64: 1, 1, 8>}, {pipeline_mode = #tpu.pipeline_mode<synchronous>, transform_indices = @transform_4, window_bounds = array<i64: 32, 32>}, {pipeline_mode = #tpu.pipeline_mode<synchronous>, transform_indices = @transform_5, window_bounds = array<i64: 32, 32>}, {pipeline_mode = #tpu.pipeline_mode<synchronous>, transform_indices = @transform_6, window_bounds = array<i64: 32, 32>}, {pipeline_mode = #tpu.pipeline_mode<synchronous>, transform_indices = @transform_7, window_bounds = array<i64: 1, 32>}, {pipeline_mode = #tpu.pipeline_mode<synchronous>, transform_indices = @transform_8, window_bounds = array<i64: 1, 32>}, {pipeline_mode = #tpu.pipeline_mode<synchronous>, transform_indices = @transform_9, window_bounds = array<i64: 1, 32>}, {pipeline_mode = #tpu.pipeline_mode<synchronous>, transform_indices = @transform_10, window_bounds = array<i64: 4, 8, 32>}, {pipeline_mode = #tpu.pipeline_mode<synchronous>, transform_indices = @transform_11, window_bounds = array<i64: 1, 32>}, {pipeline_mode = #tpu.pipeline_mode<synchronous>, transform_indices = @transform_12, window_bounds = array<i64: 32, 64>}, {pipeline_mode = #tpu.pipeline_mode<synchronous>, transform_indices = @transform_13, window_bounds = array<i64: 1, 64>}, {pipeline_mode = #tpu.pipeline_mode<synchronous>, transform_indices = @transform_14, window_bounds = array<i64: 64, 32>}, {pipeline_mode = #tpu.pipeline_mode<synchronous>, transform_indices = @transform_15, window_bounds = array<i64: 1, 32>}, {pipeline_mode = #tpu.pipeline_mode<synchronous>, transform_indices = @transform_16, window_bounds = array<i64: 1, 32>}, {pipeline_mode = #tpu.pipeline_mode<synchronous>, transform_indices = @transform_17, window_bounds = array<i64: 1, 32>}, {transform_indices = @transform_18, window_bounds = array<i64: 1, 8, 32>}, {transform_indices = @transform_19, window_bounds = array<i64: 1, 8, 8>}, {transform_indices = @transform_20, window_bounds = array<i64: 1, 8, 8>}]} {
    %c0 = arith.constant 0 : index
    %c0_0 = arith.constant 0 : index
    %c0_1 = arith.constant 0 : index
    %0 = vector.load %arg1[%c0, %c0_0, %c0_1] : memref<1x8x32xbf16, #tpu.memory_space<vmem>>, vector<1x8x32xbf16>
    %1 = vector.shape_cast %0 : vector<1x8x32xbf16> to vector<8x32xbf16>
    %c0_2 = arith.constant 0 : index
    %c0_3 = arith.constant 0 : index
    %c0_4 = arith.constant 0 : index
    %2 = vector.load %arg2[%c0_2, %c0_3, %c0_4] : memref<1x8x32xbf16, #tpu.memory_space<vmem>>, vector<1x8x32xbf16>
    %3 = vector.shape_cast %2 : vector<1x8x32xbf16> to vector<8x32xbf16>
    %c0_5 = arith.constant 0 : index
    %c0_6 = arith.constant 0 : index
    %c0_7 = arith.constant 0 : index
    %4 = vector.load %arg3[%c0_5, %c0_6, %c0_7] : memref<1x1x8xf32, #tpu.memory_space<vmem>>, vector<1x1x8xf32>
    %5 = vector.shape_cast %4 : vector<1x1x8xf32> to vector<1x8xf32>
    %c0_8 = arith.constant 0 : index
    %c0_9 = arith.constant 0 : index
    %c0_10 = arith.constant 0 : index
    %6 = vector.load %arg4[%c0_8, %c0_9, %c0_10] : memref<1x1x8xf32, #tpu.memory_space<vmem>>, vector<1x1x8xf32>
    %7 = vector.shape_cast %6 : vector<1x1x8xf32> to vector<1x8xf32>
    %8 = tpu.iota {dimensions = array<i32: 0>} : vector<8x8xi32>
    %9 = tpu.iota {dimensions = array<i32: 1>} : vector<8x8xi32>
    %10 = arith.cmpi sle, %9, %8 : vector<8x8xi32>
    %cst = arith.constant 0.000000e+00 : f32
    %cst_11 = arith.constant -1.000000e+30 : f32
    %11 = vector.broadcast %cst : f32 to vector<8x8xf32>
    %12 = vector.broadcast %cst_11 : f32 to vector<8x8xf32>
    %13 = arith.select %10, %11, %12 : vector<8x8xi1>, vector<8x8xf32>
    %14 = vector.broadcast %5 : vector<1x8xf32> to vector<8x8xf32>
    %15 = arith.addf %13, %14 : vector<8x8xf32>
    %c0_12 = arith.constant 0 : index
    %c0_13 = arith.constant 0 : index
    %16 = vector.load %arg5[%c0_12, %c0_13] : memref<32x32xbf16, #tpu.memory_space<vmem>>, vector<32x32xbf16>
    %cst_14 = arith.constant dense<0.000000e+00> : vector<8x32xf32>
    %17 = tpu.matmul %1, %16, %cst_14 {dimension_numbers = #tpu.dot_dimension_numbers<[1], [0], [0], [1], [0, 0, 1, 1], [], []>} : vector<8x32xbf16>, vector<32x32xbf16>, vector<8x32xf32> -> vector<8x32xf32>
    %c0_15 = arith.constant 0 : index
    %c0_16 = arith.constant 0 : index
    %18 = vector.load %arg8[%c0_15, %c0_16] : memref<1x32xf32, #tpu.memory_space<vmem>>, vector<1x32xf32>
    %19 = vector.broadcast %18 : vector<1x32xf32> to vector<8x32xf32>
    %20 = arith.addf %17, %19 : vector<8x32xf32>
    %c0_17 = arith.constant 0 : index
    %c0_18 = arith.constant 0 : index
    %21 = vector.load %arg6[%c0_17, %c0_18] : memref<32x32xbf16, #tpu.memory_space<vmem>>, vector<32x32xbf16>
    %cst_19 = arith.constant dense<0.000000e+00> : vector<8x32xf32>
    %22 = tpu.matmul %1, %21, %cst_19 {dimension_numbers = #tpu.dot_dimension_numbers<[1], [0], [0], [1], [0, 0, 1, 1], [], []>} : vector<8x32xbf16>, vector<32x32xbf16>, vector<8x32xf32> -> vector<8x32xf32>
    %c0_20 = arith.constant 0 : index
    %c0_21 = arith.constant 0 : index
    %23 = vector.load %arg9[%c0_20, %c0_21] : memref<1x32xf32, #tpu.memory_space<vmem>>, vector<1x32xf32>
    %24 = vector.broadcast %23 : vector<1x32xf32> to vector<8x32xf32>
    %25 = arith.addf %22, %24 : vector<8x32xf32>
    %c0_22 = arith.constant 0 : index
    %c0_23 = arith.constant 0 : index
    %26 = vector.load %arg7[%c0_22, %c0_23] : memref<32x32xbf16, #tpu.memory_space<vmem>>, vector<32x32xbf16>
    %cst_24 = arith.constant dense<0.000000e+00> : vector<8x32xf32>
    %27 = tpu.matmul %1, %26, %cst_24 {dimension_numbers = #tpu.dot_dimension_numbers<[1], [0], [0], [1], [0, 0, 1, 1], [], []>} : vector<8x32xbf16>, vector<32x32xbf16>, vector<8x32xf32> -> vector<8x32xf32>
    %c0_25 = arith.constant 0 : index
    %c0_26 = arith.constant 0 : index
    %28 = vector.load %arg10[%c0_25, %c0_26] : memref<1x32xf32, #tpu.memory_space<vmem>>, vector<1x32xf32>
    %29 = vector.broadcast %28 : vector<1x32xf32> to vector<8x32xf32>
    %30 = arith.addf %27, %29 : vector<8x32xf32>
    %cst_27 = arith.constant 0.353553385 : f32
    %31 = vector.broadcast %cst_27 : f32 to vector<8x32xf32>
    %32 = arith.mulf %20, %31 : vector<8x32xf32>
    %33 = vector.extract_strided_slice %32 {offsets = [0, 0], sizes = [8, 8], strides = [1, 1]} : vector<8x32xf32> to vector<8x8xf32>
    %34 = vector.extract_strided_slice %32 {offsets = [0, 8], sizes = [8, 8], strides = [1, 1]} : vector<8x32xf32> to vector<8x8xf32>
    %35 = vector.extract_strided_slice %32 {offsets = [0, 16], sizes = [8, 8], strides = [1, 1]} : vector<8x32xf32> to vector<8x8xf32>
    %36 = vector.extract_strided_slice %32 {offsets = [0, 24], sizes = [8, 8], strides = [1, 1]} : vector<8x32xf32> to vector<8x8xf32>
    %37 = vector.shape_cast %33 : vector<8x8xf32> to vector<1x8x8xf32>
    %38 = vector.shape_cast %34 : vector<8x8xf32> to vector<1x8x8xf32>
    %39 = vector.shape_cast %35 : vector<8x8xf32> to vector<1x8x8xf32>
    %40 = vector.shape_cast %36 : vector<8x8xf32> to vector<1x8x8xf32>
    %41 = tpu.concatenate %37, %38, %39, %40 in 0 : vector<1x8x8xf32>, vector<1x8x8xf32>, vector<1x8x8xf32>, vector<1x8x8xf32> -> vector<4x8x8xf32>
    %42 = arith.truncf %41 : vector<4x8x8xf32> to vector<4x8x8xbf16>
    %43 = vector.extract_strided_slice %25 {offsets = [0, 0], sizes = [8, 8], strides = [1, 1]} : vector<8x32xf32> to vector<8x8xf32>
    %44 = vector.extract_strided_slice %25 {offsets = [0, 8], sizes = [8, 8], strides = [1, 1]} : vector<8x32xf32> to vector<8x8xf32>
    %45 = vector.extract_strided_slice %25 {offsets = [0, 16], sizes = [8, 8], strides = [1, 1]} : vector<8x32xf32> to vector<8x8xf32>
    %46 = vector.extract_strided_slice %25 {offsets = [0, 24], sizes = [8, 8], strides = [1, 1]} : vector<8x32xf32> to vector<8x8xf32>
    %47 = vector.shape_cast %43 : vector<8x8xf32> to vector<1x8x8xf32>
    %48 = vector.shape_cast %44 : vector<8x8xf32> to vector<1x8x8xf32>
    %49 = vector.shape_cast %45 : vector<8x8xf32> to vector<1x8x8xf32>
    %50 = vector.shape_cast %46 : vector<8x8xf32> to vector<1x8x8xf32>
    %51 = tpu.concatenate %47, %48, %49, %50 in 0 : vector<1x8x8xf32>, vector<1x8x8xf32>, vector<1x8x8xf32>, vector<1x8x8xf32> -> vector<4x8x8xf32>
    %52 = arith.truncf %51 : vector<4x8x8xf32> to vector<4x8x8xbf16>
    %53 = vector.extract_strided_slice %30 {offsets = [0, 0], sizes = [8, 8], strides = [1, 1]} : vector<8x32xf32> to vector<8x8xf32>
    %54 = vector.extract_strided_slice %30 {offsets = [0, 8], sizes = [8, 8], strides = [1, 1]} : vector<8x32xf32> to vector<8x8xf32>
    %55 = vector.extract_strided_slice %30 {offsets = [0, 16], sizes = [8, 8], strides = [1, 1]} : vector<8x32xf32> to vector<8x8xf32>
    %56 = vector.extract_strided_slice %30 {offsets = [0, 24], sizes = [8, 8], strides = [1, 1]} : vector<8x32xf32> to vector<8x8xf32>
    %57 = vector.shape_cast %53 : vector<8x8xf32> to vector<1x8x8xf32>
    %58 = vector.shape_cast %54 : vector<8x8xf32> to vector<1x8x8xf32>
    %59 = vector.shape_cast %55 : vector<8x8xf32> to vector<1x8x8xf32>
    %60 = vector.shape_cast %56 : vector<8x8xf32> to vector<1x8x8xf32>
    %61 = tpu.concatenate %57, %58, %59, %60 in 0 : vector<1x8x8xf32>, vector<1x8x8xf32>, vector<1x8x8xf32>, vector<1x8x8xf32> -> vector<4x8x8xf32>
    %62 = arith.truncf %61 : vector<4x8x8xf32> to vector<4x8x8xbf16>
    "tpu.trace_start"() <{level = 10 : i32, message = "hqd,hkd->hqk"}> : () -> ()
    %cst_28 = arith.constant dense<0.000000e+00> : vector<4x8x8xf32>
    %63 = tpu.matmul %42, %52, %cst_28 {dimension_numbers = #tpu.dot_dimension_numbers<[2], [2], [1], [1], [0, 0, 0, 1, 1, 1], [0], [0]>} : vector<4x8x8xbf16>, vector<4x8x8xbf16>, vector<4x8x8xf32> -> vector<4x8x8xf32>
    "tpu.trace_stop"() : () -> ()
    %64 = vector.shape_cast %15 : vector<8x8xf32> to vector<1x8x8xf32>
    %65 = vector.broadcast %64 : vector<1x8x8xf32> to vector<4x8x8xf32>
    %66 = arith.addf %63, %65 : vector<4x8x8xf32>
    %cst_29 = arith.constant dense<0xFF800000> : vector<4x8xf32>
    %67 = vector.multi_reduction <maximumf>, %66, %cst_29 [2] : vector<4x8x8xf32> to vector<4x8xf32>
    %68 = vector.shape_cast %67 : vector<4x8xf32> to vector<4x8x1xf32>
    %69 = vector.broadcast %68 : vector<4x8x1xf32> to vector<4x8x8xf32>
    %70 = arith.subf %66, %69 : vector<4x8x8xf32>
    %71 = math.exp %70 : vector<4x8x8xf32>
    %cst_30 = arith.constant dense<0.000000e+00> : vector<4x8xf32>
    %72 = vector.multi_reduction <add>, %71, %cst_30 [2] : vector<4x8x8xf32> to vector<4x8xf32>
    %73 = vector.shape_cast %72 : vector<4x8xf32> to vector<4x8x1xf32>
    %74 = tpu.reciprocal %73 {approx = true} : vector<4x8x1xf32> -> vector<4x8x1xf32>
    %75 = vector.broadcast %74 : vector<4x8x1xf32> to vector<4x8x8xf32>
    %76 = arith.mulf %71, %75 : vector<4x8x8xf32>
    %cst_31 = arith.constant dense<0.000000e+00> : vector<8x8xf32>
    %77 = vector.multi_reduction <add>, %76, %cst_31 [0] : vector<4x8x8xf32> to vector<8x8xf32>
    %cst_32 = arith.constant 2.500000e-01 : f32
    %78 = vector.broadcast %cst_32 : f32 to vector<8x8xf32>
    %79 = arith.mulf %77, %78 : vector<8x8xf32>
    %80 = arith.truncf %76 : vector<4x8x8xf32> to vector<4x8x8xbf16>
    "tpu.trace_start"() <{level = 10 : i32, message = "hqk,hkd->hqd"}> : () -> ()
    %cst_33 = arith.constant dense<0.000000e+00> : vector<4x8x8xf32>
    %81 = tpu.matmul %80, %62, %cst_33 {dimension_numbers = #tpu.dot_dimension_numbers<[2], [1], [1], [2], [0, 0, 0, 1, 1, 2], [0], [0]>} : vector<4x8x8xbf16>, vector<4x8x8xbf16>, vector<4x8x8xf32> -> vector<4x8x8xf32>
    "tpu.trace_stop"() : () -> ()
    %82 = arith.truncf %81 : vector<4x8x8xf32> to vector<4x8x8xbf16>
    %c0_34 = arith.constant 0 : index
    %c0_35 = arith.constant 0 : index
    %c0_36 = arith.constant 0 : index
    %83 = vector.load %arg11[%c0_34, %c0_35, %c0_36] : memref<4x8x32xbf16, #tpu.memory_space<vmem>>, vector<4x8x32xbf16>
    "tpu.trace_start"() <{level = 10 : i32, message = "hqd,hde->hqe"}> : () -> ()
    %cst_37 = arith.constant dense<0.000000e+00> : vector<4x8x32xf32>
    %84 = tpu.matmul %82, %83, %cst_37 {dimension_numbers = #tpu.dot_dimension_numbers<[2], [1], [1], [2], [0, 0, 0, 1, 1, 2], [0], [0]>} : vector<4x8x8xbf16>, vector<4x8x32xbf16>, vector<4x8x32xf32> -> vector<4x8x32xf32>
    "tpu.trace_stop"() : () -> ()
    %cst_38 = arith.constant dense<0.000000e+00> : vector<8x32xf32>
    %85 = vector.multi_reduction <add>, %84, %cst_38 [0] : vector<4x8x32xf32> to vector<8x32xf32>
    %c0_39 = arith.constant 0 : index
    %c0_40 = arith.constant 0 : index
    %86 = vector.load %arg12[%c0_39, %c0_40] : memref<1x32xf32, #tpu.memory_space<vmem>>, vector<1x32xf32>
    %87 = vector.broadcast %86 : vector<1x32xf32> to vector<8x32xf32>
    %88 = arith.addf %85, %87 : vector<8x32xf32>
    %89 = arith.truncf %88 : vector<8x32xf32> to vector<8x32xbf16>
    %c0_41 = arith.constant 0 : index
    %c0_42 = arith.constant 0 : index
    %90 = vector.load %arg5[%c0_41, %c0_42] : memref<32x32xbf16, #tpu.memory_space<vmem>>, vector<32x32xbf16>
    %cst_43 = arith.constant dense<0.000000e+00> : vector<8x32xf32>
    %91 = tpu.matmul %89, %90, %cst_43 {dimension_numbers = #tpu.dot_dimension_numbers<[1], [0], [0], [1], [0, 0, 1, 1], [], []>} : vector<8x32xbf16>, vector<32x32xbf16>, vector<8x32xf32> -> vector<8x32xf32>
    %c0_44 = arith.constant 0 : index
    %c0_45 = arith.constant 0 : index
    %92 = vector.load %arg8[%c0_44, %c0_45] : memref<1x32xf32, #tpu.memory_space<vmem>>, vector<1x32xf32>
    %93 = vector.broadcast %92 : vector<1x32xf32> to vector<8x32xf32>
    %94 = arith.addf %91, %93 : vector<8x32xf32>
    %c0_46 = arith.constant 0 : index
    %c0_47 = arith.constant 0 : index
    %95 = vector.load %arg6[%c0_46, %c0_47] : memref<32x32xbf16, #tpu.memory_space<vmem>>, vector<32x32xbf16>
    %cst_48 = arith.constant dense<0.000000e+00> : vector<8x32xf32>
    %96 = tpu.matmul %3, %95, %cst_48 {dimension_numbers = #tpu.dot_dimension_numbers<[1], [0], [0], [1], [0, 0, 1, 1], [], []>} : vector<8x32xbf16>, vector<32x32xbf16>, vector<8x32xf32> -> vector<8x32xf32>
    %c0_49 = arith.constant 0 : index
    %c0_50 = arith.constant 0 : index
    %97 = vector.load %arg9[%c0_49, %c0_50] : memref<1x32xf32, #tpu.memory_space<vmem>>, vector<1x32xf32>
    %98 = vector.broadcast %97 : vector<1x32xf32> to vector<8x32xf32>
    %99 = arith.addf %96, %98 : vector<8x32xf32>
    %c0_51 = arith.constant 0 : index
    %c0_52 = arith.constant 0 : index
    %100 = vector.load %arg7[%c0_51, %c0_52] : memref<32x32xbf16, #tpu.memory_space<vmem>>, vector<32x32xbf16>
    %cst_53 = arith.constant dense<0.000000e+00> : vector<8x32xf32>
    %101 = tpu.matmul %3, %100, %cst_53 {dimension_numbers = #tpu.dot_dimension_numbers<[1], [0], [0], [1], [0, 0, 1, 1], [], []>} : vector<8x32xbf16>, vector<32x32xbf16>, vector<8x32xf32> -> vector<8x32xf32>
    %c0_54 = arith.constant 0 : index
    %c0_55 = arith.constant 0 : index
    %102 = vector.load %arg10[%c0_54, %c0_55] : memref<1x32xf32, #tpu.memory_space<vmem>>, vector<1x32xf32>
    %103 = vector.broadcast %102 : vector<1x32xf32> to vector<8x32xf32>
    %104 = arith.addf %101, %103 : vector<8x32xf32>
    %cst_56 = arith.constant 0.353553385 : f32
    %105 = vector.broadcast %cst_56 : f32 to vector<8x32xf32>
    %106 = arith.mulf %94, %105 : vector<8x32xf32>
    %107 = vector.extract_strided_slice %106 {offsets = [0, 0], sizes = [8, 8], strides = [1, 1]} : vector<8x32xf32> to vector<8x8xf32>
    %108 = vector.extract_strided_slice %106 {offsets = [0, 8], sizes = [8, 8], strides = [1, 1]} : vector<8x32xf32> to vector<8x8xf32>
    %109 = vector.extract_strided_slice %106 {offsets = [0, 16], sizes = [8, 8], strides = [1, 1]} : vector<8x32xf32> to vector<8x8xf32>
    %110 = vector.extract_strided_slice %106 {offsets = [0, 24], sizes = [8, 8], strides = [1, 1]} : vector<8x32xf32> to vector<8x8xf32>
    %111 = vector.shape_cast %107 : vector<8x8xf32> to vector<1x8x8xf32>
    %112 = vector.shape_cast %108 : vector<8x8xf32> to vector<1x8x8xf32>
    %113 = vector.shape_cast %109 : vector<8x8xf32> to vector<1x8x8xf32>
    %114 = vector.shape_cast %110 : vector<8x8xf32> to vector<1x8x8xf32>
    %115 = tpu.concatenate %111, %112, %113, %114 in 0 : vector<1x8x8xf32>, vector<1x8x8xf32>, vector<1x8x8xf32>, vector<1x8x8xf32> -> vector<4x8x8xf32>
    %116 = arith.truncf %115 : vector<4x8x8xf32> to vector<4x8x8xbf16>
    %117 = vector.extract_strided_slice %99 {offsets = [0, 0], sizes = [8, 8], strides = [1, 1]} : vector<8x32xf32> to vector<8x8xf32>
    %118 = vector.extract_strided_slice %99 {offsets = [0, 8], sizes = [8, 8], strides = [1, 1]} : vector<8x32xf32> to vector<8x8xf32>
    %119 = vector.extract_strided_slice %99 {offsets = [0, 16], sizes = [8, 8], strides = [1, 1]} : vector<8x32xf32> to vector<8x8xf32>
    %120 = vector.extract_strided_slice %99 {offsets = [0, 24], sizes = [8, 8], strides = [1, 1]} : vector<8x32xf32> to vector<8x8xf32>
    %121 = vector.shape_cast %117 : vector<8x8xf32> to vector<1x8x8xf32>
    %122 = vector.shape_cast %118 : vector<8x8xf32> to vector<1x8x8xf32>
    %123 = vector.shape_cast %119 : vector<8x8xf32> to vector<1x8x8xf32>
    %124 = vector.shape_cast %120 : vector<8x8xf32> to vector<1x8x8xf32>
    %125 = tpu.concatenate %121, %122, %123, %124 in 0 : vector<1x8x8xf32>, vector<1x8x8xf32>, vector<1x8x8xf32>, vector<1x8x8xf32> -> vector<4x8x8xf32>
    %126 = arith.truncf %125 : vector<4x8x8xf32> to vector<4x8x8xbf16>
    %127 = vector.extract_strided_slice %104 {offsets = [0, 0], sizes = [8, 8], strides = [1, 1]} : vector<8x32xf32> to vector<8x8xf32>
    %128 = vector.extract_strided_slice %104 {offsets = [0, 8], sizes = [8, 8], strides = [1, 1]} : vector<8x32xf32> to vector<8x8xf32>
    %129 = vector.extract_strided_slice %104 {offsets = [0, 16], sizes = [8, 8], strides = [1, 1]} : vector<8x32xf32> to vector<8x8xf32>
    %130 = vector.extract_strided_slice %104 {offsets = [0, 24], sizes = [8, 8], strides = [1, 1]} : vector<8x32xf32> to vector<8x8xf32>
    %131 = vector.shape_cast %127 : vector<8x8xf32> to vector<1x8x8xf32>
    %132 = vector.shape_cast %128 : vector<8x8xf32> to vector<1x8x8xf32>
    %133 = vector.shape_cast %129 : vector<8x8xf32> to vector<1x8x8xf32>
    %134 = vector.shape_cast %130 : vector<8x8xf32> to vector<1x8x8xf32>
    %135 = tpu.concatenate %131, %132, %133, %134 in 0 : vector<1x8x8xf32>, vector<1x8x8xf32>, vector<1x8x8xf32>, vector<1x8x8xf32> -> vector<4x8x8xf32>
    %136 = arith.truncf %135 : vector<4x8x8xf32> to vector<4x8x8xbf16>
    "tpu.trace_start"() <{level = 10 : i32, message = "hqd,hkd->hqk"}> : () -> ()
    %cst_57 = arith.constant dense<0.000000e+00> : vector<4x8x8xf32>
    %137 = tpu.matmul %116, %126, %cst_57 {dimension_numbers = #tpu.dot_dimension_numbers<[2], [2], [1], [1], [0, 0, 0, 1, 1, 1], [0], [0]>} : vector<4x8x8xbf16>, vector<4x8x8xbf16>, vector<4x8x8xf32> -> vector<4x8x8xf32>
    "tpu.trace_stop"() : () -> ()
    %138 = vector.shape_cast %7 : vector<1x8xf32> to vector<1x1x8xf32>
    %139 = vector.broadcast %138 : vector<1x1x8xf32> to vector<4x8x8xf32>
    %140 = arith.addf %137, %139 : vector<4x8x8xf32>
    %cst_58 = arith.constant dense<0xFF800000> : vector<4x8xf32>
    %141 = vector.multi_reduction <maximumf>, %140, %cst_58 [2] : vector<4x8x8xf32> to vector<4x8xf32>
    %142 = vector.shape_cast %141 : vector<4x8xf32> to vector<4x8x1xf32>
    %143 = vector.broadcast %142 : vector<4x8x1xf32> to vector<4x8x8xf32>
    %144 = arith.subf %140, %143 : vector<4x8x8xf32>
    %145 = math.exp %144 : vector<4x8x8xf32>
    %cst_59 = arith.constant dense<0.000000e+00> : vector<4x8xf32>
    %146 = vector.multi_reduction <add>, %145, %cst_59 [2] : vector<4x8x8xf32> to vector<4x8xf32>
    %147 = vector.shape_cast %146 : vector<4x8xf32> to vector<4x8x1xf32>
    %148 = tpu.reciprocal %147 {approx = true} : vector<4x8x1xf32> -> vector<4x8x1xf32>
    %149 = vector.broadcast %148 : vector<4x8x1xf32> to vector<4x8x8xf32>
    %150 = arith.mulf %145, %149 : vector<4x8x8xf32>
    %cst_60 = arith.constant dense<0.000000e+00> : vector<8x8xf32>
    %151 = vector.multi_reduction <add>, %150, %cst_60 [0] : vector<4x8x8xf32> to vector<8x8xf32>
    %cst_61 = arith.constant 2.500000e-01 : f32
    %152 = vector.broadcast %cst_61 : f32 to vector<8x8xf32>
    %153 = arith.mulf %151, %152 : vector<8x8xf32>
    %154 = arith.truncf %150 : vector<4x8x8xf32> to vector<4x8x8xbf16>
    "tpu.trace_start"() <{level = 10 : i32, message = "hqk,hkd->hqd"}> : () -> ()
    %cst_62 = arith.constant dense<0.000000e+00> : vector<4x8x8xf32>
    %155 = tpu.matmul %154, %136, %cst_62 {dimension_numbers = #tpu.dot_dimension_numbers<[2], [1], [1], [2], [0, 0, 0, 1, 1, 2], [0], [0]>} : vector<4x8x8xbf16>, vector<4x8x8xbf16>, vector<4x8x8xf32> -> vector<4x8x8xf32>
    "tpu.trace_stop"() : () -> ()
    %156 = arith.truncf %155 : vector<4x8x8xf32> to vector<4x8x8xbf16>
    %c0_63 = arith.constant 0 : index
    %c0_64 = arith.constant 0 : index
    %c0_65 = arith.constant 0 : index
    %157 = vector.load %arg11[%c0_63, %c0_64, %c0_65] : memref<4x8x32xbf16, #tpu.memory_space<vmem>>, vector<4x8x32xbf16>
    "tpu.trace_start"() <{level = 10 : i32, message = "hqd,hde->hqe"}> : () -> ()
    %cst_66 = arith.constant dense<0.000000e+00> : vector<4x8x32xf32>
    %158 = tpu.matmul %156, %157, %cst_66 {dimension_numbers = #tpu.dot_dimension_numbers<[2], [1], [1], [2], [0, 0, 0, 1, 1, 2], [0], [0]>} : vector<4x8x8xbf16>, vector<4x8x32xbf16>, vector<4x8x32xf32> -> vector<4x8x32xf32>
    "tpu.trace_stop"() : () -> ()
    %cst_67 = arith.constant dense<0.000000e+00> : vector<8x32xf32>
    %159 = vector.multi_reduction <add>, %158, %cst_67 [0] : vector<4x8x32xf32> to vector<8x32xf32>
    %c0_68 = arith.constant 0 : index
    %c0_69 = arith.constant 0 : index
    %160 = vector.load %arg12[%c0_68, %c0_69] : memref<1x32xf32, #tpu.memory_space<vmem>>, vector<1x32xf32>
    %161 = vector.broadcast %160 : vector<1x32xf32> to vector<8x32xf32>
    %162 = arith.addf %159, %161 : vector<8x32xf32>
    %163 = arith.truncf %162 : vector<8x32xf32> to vector<8x32xbf16>
    %c0_70 = arith.constant 0 : index
    %c0_71 = arith.constant 0 : index
    %164 = vector.load %arg13[%c0_70, %c0_71] : memref<32x64xbf16, #tpu.memory_space<vmem>>, vector<32x64xbf16>
    %cst_72 = arith.constant dense<0.000000e+00> : vector<8x64xf32>
    %165 = tpu.matmul %163, %164, %cst_72 {dimension_numbers = #tpu.dot_dimension_numbers<[1], [0], [0], [1], [0, 0, 1, 1], [], []>} : vector<8x32xbf16>, vector<32x64xbf16>, vector<8x64xf32> -> vector<8x64xf32>
    %c0_73 = arith.constant 0 : index
    %c0_74 = arith.constant 0 : index
    %166 = vector.load %arg14[%c0_73, %c0_74] : memref<1x64xf32, #tpu.memory_space<vmem>>, vector<1x64xf32>
    %167 = vector.broadcast %166 : vector<1x64xf32> to vector<8x64xf32>
    %168 = arith.addf %165, %167 : vector<8x64xf32>
    %cst_75 = arith.constant 0.000000e+00 : f32
    %169 = vector.broadcast %cst_75 : f32 to vector<8x64xf32>
    %170 = arith.maximumf %168, %169 : vector<8x64xf32>
    %171 = arith.truncf %170 : vector<8x64xf32> to vector<8x64xbf16>
    %c0_76 = arith.constant 0 : index
    %c0_77 = arith.constant 0 : index
    %172 = vector.load %arg15[%c0_76, %c0_77] : memref<64x32xbf16, #tpu.memory_space<vmem>>, vector<64x32xbf16>
    %cst_78 = arith.constant dense<0.000000e+00> : vector<8x32xf32>
    %173 = tpu.matmul %171, %172, %cst_78 {dimension_numbers = #tpu.dot_dimension_numbers<[1], [0], [0], [1], [0, 0, 1, 1], [], []>} : vector<8x64xbf16>, vector<64x32xbf16>, vector<8x32xf32> -> vector<8x32xf32>
    %c0_79 = arith.constant 0 : index
    %c0_80 = arith.constant 0 : index
    %174 = vector.load %arg16[%c0_79, %c0_80] : memref<1x32xf32, #tpu.memory_space<vmem>>, vector<1x32xf32>
    %175 = vector.broadcast %174 : vector<1x32xf32> to vector<8x32xf32>
    %176 = arith.addf %173, %175 : vector<8x32xf32>
    %177 = arith.addf %162, %176 : vector<8x32xf32>
    %cst_81 = arith.constant dense<0.000000e+00> : vector<8xf32>
    %178 = vector.multi_reduction <add>, %177, %cst_81 [1] : vector<8x32xf32> to vector<8xf32>
    %179 = vector.shape_cast %178 : vector<8xf32> to vector<8x1xf32>
    %cst_82 = arith.constant 3.200000e+01 : f32
    %180 = vector.broadcast %cst_82 : f32 to vector<8x1xf32>
    %181 = arith.divf %179, %180 : vector<8x1xf32>
    %182 = vector.broadcast %181 : vector<8x1xf32> to vector<8x32xf32>
    %183 = arith.subf %177, %182 : vector<8x32xf32>
    %184 = arith.mulf %183, %183 : vector<8x32xf32>
    %cst_83 = arith.constant dense<0.000000e+00> : vector<8xf32>
    %185 = vector.multi_reduction <add>, %184, %cst_83 [1] : vector<8x32xf32> to vector<8xf32>
    %186 = vector.shape_cast %185 : vector<8xf32> to vector<8x1xf32>
    %cst_84 = arith.constant 3.200000e+01 : f32
    %187 = vector.broadcast %cst_84 : f32 to vector<8x1xf32>
    %188 = arith.divf %186, %187 : vector<8x1xf32>
    %189 = vector.broadcast %181 : vector<8x1xf32> to vector<8x32xf32>
    %190 = arith.subf %177, %189 : vector<8x32xf32>
    %cst_85 = arith.constant 9.99999974E-6 : f32
    %191 = vector.broadcast %cst_85 : f32 to vector<8x1xf32>
    %192 = arith.addf %188, %191 : vector<8x1xf32>
    %193 = math.rsqrt %192 : vector<8x1xf32>
    %194 = vector.broadcast %193 : vector<8x1xf32> to vector<8x32xf32>
    %195 = arith.mulf %190, %194 : vector<8x32xf32>
    %c0_86 = arith.constant 0 : index
    %c0_87 = arith.constant 0 : index
    %196 = vector.load %arg17[%c0_86, %c0_87] : memref<1x32xf32, #tpu.memory_space<vmem>>, vector<1x32xf32>
    %197 = vector.broadcast %196 : vector<1x32xf32> to vector<8x32xf32>
    %198 = arith.mulf %195, %197 : vector<8x32xf32>
    %c0_88 = arith.constant 0 : index
    %c0_89 = arith.constant 0 : index
    %199 = vector.load %arg18[%c0_88, %c0_89] : memref<1x32xf32, #tpu.memory_space<vmem>>, vector<1x32xf32>
    %200 = vector.broadcast %199 : vector<1x32xf32> to vector<8x32xf32>
    %201 = arith.addf %198, %200 : vector<8x32xf32>
    %c0_90 = arith.constant 0 : index
    %c0_91 = arith.constant 0 : index
    %c0_92 = arith.constant 0 : index
    %202 = vector.load %arg19[%c0_90, %c0_91, %c0_92] : memref<1x8x32xf32, #tpu.memory_space<vmem>>, vector<1x8x32xf32>
    %203 = vector.shape_cast %202 : vector<1x8x32xf32> to vector<8x32xf32>
    %204 = vector.shape_cast %201 : vector<8x32xf32> to vector<1x8x32xf32>
    tpu.vector_store %arg19[%c0_90, %c0_91, %c0_92], %204 {strides = array<i32>} : memref<1x8x32xf32, #tpu.memory_space<vmem>>, vector<1x8x32xf32>,
    %c0_93 = arith.constant 0 : index
    %c0_94 = arith.constant 0 : index
    %c0_95 = arith.constant 0 : index
    %205 = vector.load %arg20[%c0_93, %c0_94, %c0_95] : memref<1x8x8xf32, #tpu.memory_space<vmem>>, vector<1x8x8xf32>
    %206 = vector.shape_cast %205 : vector<1x8x8xf32> to vector<8x8xf32>
    %207 = vector.shape_cast %79 : vector<8x8xf32> to vector<1x8x8xf32>
    tpu.vector_store %arg20[%c0_93, %c0_94, %c0_95], %207 {strides = array<i32>} : memref<1x8x8xf32, #tpu.memory_space<vmem>>, vector<1x8x8xf32>,
    %c0_96 = arith.constant 0 : index
    %c0_97 = arith.constant 0 : index
    %c0_98 = arith.constant 0 : index
    %208 = vector.load %arg21[%c0_96, %c0_97, %c0_98] : memref<1x8x8xf32, #tpu.memory_space<vmem>>, vector<1x8x8xf32>
    %209 = vector.shape_cast %208 : vector<1x8x8xf32> to vector<8x8xf32>
    %210 = vector.shape_cast %153 : vector<8x8xf32> to vector<1x8x8xf32>
    tpu.vector_store %arg21[%c0_96, %c0_97, %c0_98], %210 {strides = array<i32>} : memref<1x8x8xf32, #tpu.memory_space<vmem>>, vector<1x8x8xf32>,
    return
  }
  func.func @transform_0(%arg0: i32) -> (i32, i32, i32) {
    %c0_i32 = arith.constant 0 : i32
    %c0_i32_0 = arith.constant 0 : i32
    %c0_i32_1 = arith.constant 0 : i32
    return %arg0, %c0_i32, %c0_i32_0 : i32, i32, i32
  }
  func.func @transform_1(%arg0: i32) -> (i32, i32, i32) {
    %c0_i32 = arith.constant 0 : i32
    %c0_i32_0 = arith.constant 0 : i32
    %c0_i32_1 = arith.constant 0 : i32
    return %arg0, %c0_i32, %c0_i32_0 : i32, i32, i32
  }
  func.func @transform_2(%arg0: i32) -> (i32, i32, i32) {
    %c0_i32 = arith.constant 0 : i32
    %c0_i32_0 = arith.constant 0 : i32
    %c0_i32_1 = arith.constant 0 : i32
    return %arg0, %c0_i32, %c0_i32_0 : i32, i32, i32
  }
  func.func @transform_3(%arg0: i32) -> (i32, i32, i32) {
    %c0_i32 = arith.constant 0 : i32
    %c0_i32_0 = arith.constant 0 : i32
    %c0_i32_1 = arith.constant 0 : i32
    return %arg0, %c0_i32, %c0_i32_0 : i32, i32, i32
  }
  func.func @transform_4(%arg0: i32) -> (i32, i32) {
    %c0_i32 = arith.constant 0 : i32
    %c0_i32_0 = arith.constant 0 : i32
    %c0_i32_1 = arith.constant 0 : i32
    return %c0_i32, %c0_i32_0 : i32, i32
  }
  func.func @transform_5(%arg0: i32) -> (i32, i32) {
    %c0_i32 = arith.constant 0 : i32
    %c0_i32_0 = arith.constant 0 : i32
    %c0_i32_1 = arith.constant 0 : i32
    return %c0_i32, %c0_i32_0 : i32, i32
  }
  func.func @transform_6(%arg0: i32) -> (i32, i32) {
    %c0_i32 = arith.constant 0 : i32
    %c0_i32_0 = arith.constant 0 : i32
    %c0_i32_1 = arith.constant 0 : i32
    return %c0_i32, %c0_i32_0 : i32, i32
  }
  func.func @transform_7(%arg0: i32) -> (i32, i32) {
    %c0_i32 = arith.constant 0 : i32
    %c0_i32_0 = arith.constant 0 : i32
    %c0_i32_1 = arith.constant 0 : i32
    return %c0_i32, %c0_i32_0 : i32, i32
  }
  func.func @transform_8(%arg0: i32) -> (i32, i32) {
    %c0_i32 = arith.constant 0 : i32
    %c0_i32_0 = arith.constant 0 : i32
    %c0_i32_1 = arith.constant 0 : i32
    return %c0_i32, %c0_i32_0 : i32, i32
  }
  func.func @transform_9(%arg0: i32) -> (i32, i32) {
    %c0_i32 = arith.constant 0 : i32
    %c0_i32_0 = arith.constant 0 : i32
    %c0_i32_1 = arith.constant 0 : i32
    return %c0_i32, %c0_i32_0 : i32, i32
  }
  func.func @transform_10(%arg0: i32) -> (i32, i32, i32) {
    %c0_i32 = arith.constant 0 : i32
    %c0_i32_0 = arith.constant 0 : i32
    %c0_i32_1 = arith.constant 0 : i32
    %c0_i32_2 = arith.constant 0 : i32
    return %c0_i32, %c0_i32_0, %c0_i32_1 : i32, i32, i32
  }
  func.func @transform_11(%arg0: i32) -> (i32, i32) {
    %c0_i32 = arith.constant 0 : i32
    %c0_i32_0 = arith.constant 0 : i32
    %c0_i32_1 = arith.constant 0 : i32
    return %c0_i32, %c0_i32_0 : i32, i32
  }
  func.func @transform_12(%arg0: i32) -> (i32, i32) {
    %c0_i32 = arith.constant 0 : i32
    %c0_i32_0 = arith.constant 0 : i32
    %c0_i32_1 = arith.constant 0 : i32
    return %c0_i32, %c0_i32_0 : i32, i32
  }
  func.func @transform_13(%arg0: i32) -> (i32, i32) {
    %c0_i32 = arith.constant 0 : i32
    %c0_i32_0 = arith.constant 0 : i32
    %c0_i32_1 = arith.constant 0 : i32
    return %c0_i32, %c0_i32_0 : i32, i32
  }
  func.func @transform_14(%arg0: i32) -> (i32, i32) {
    %c0_i32 = arith.constant 0 : i32
    %c0_i32_0 = arith.constant 0 : i32
    %c0_i32_1 = arith.constant 0 : i32
    return %c0_i32, %c0_i32_0 : i32, i32
  }
  func.func @transform_15(%arg0: i32) -> (i32, i32) {
    %c0_i32 = arith.constant 0 : i32
    %c0_i32_0 = arith.constant 0 : i32
    %c0_i32_1 = arith.constant 0 : i32
    return %c0_i32, %c0_i32_0 : i32, i32
  }
  func.func @transform_16(%arg0: i32) -> (i32, i32) {
    %c0_i32 = arith.constant 0 : i32
    %c0_i32_0 = arith.constant 0 : i32
    %c0_i32_1 = arith.constant 0 : i32
    return %c0_i32, %c0_i32_0 : i32, i32
  }
  func.func @transform_17(%arg0: i32) -> (i32, i32) {
    %c0_i32 = arith.constant 0 : i32
    %c0_i32_0 = arith.constant 0 : i32
    %c0_i32_1 = arith.constant 0 : i32
    return %c0_i32, %c0_i32_0 : i32, i32
  }
  func.func @transform_18(%arg0: i32) -> (i32, i32, i32) {
    %c0_i32 = arith.constant 0 : i32
    %c0_i32_0 = arith.constant 0 : i32
    %c0_i32_1 = arith.constant 0 : i32
    return %arg0, %c0_i32, %c0_i32_0 : i32, i32, i32
  }
  func.func @transform_19(%arg0: i32) -> (i32, i32, i32) {
    %c0_i32 = arith.constant 0 : i32
    %c0_i32_0 = arith.constant 0 : i32
    %c0_i32_1 = arith.constant 0 : i32
    return %arg0, %c0_i32, %c0_i32_0 : i32, i32, i32
  }
  func.func @transform_20(%arg0: i32) -> (i32, i32, i32) {
    %c0_i32 = arith.constant 0 : i32
    %c0_i32_0 = arith.constant 0 : i32
    %c0_i32_1 = arith.constant 0 : i32
    return %arg0, %c0_i32, %c0_i32_0 : i32, i32, i32
  }
}

</mosaic_0001>

<llo_original>
// kernel: tpu_custom_call.1
$region0: #{tpu_custom_call.1}
  #allocation0 [shape = 'u32[]', space=smem, size = 0x4, offset = 0x4, fixed_abs, tag = 'smem constant byte address 0x4 - core index']
  #allocation1 [shape = 'u32[72,128]{1,0:T(1,128)}', space=vmem, size = 0x9000, scoped, tag = 'internal scratch']
  %s0 = inlined_call_operand.hbm [shape: bf16[2,8,32], index: 0, kind: input, shape index: {}]
  %s1 = inlined_call_operand.hbm [shape: bf16[2,8,32], index: 1, kind: input, shape index: {}]
  %s2 = inlined_call_operand.hbm [shape: f32[2,1,8], index: 2, kind: input, shape index: {}]
  %s3 = inlined_call_operand.vmem [shape: f32[2,1,8], index: 3, kind: input, shape index: {}]
  %s4 = inlined_call_operand.vmem [shape: bf16[32,32], index: 4, kind: input, shape index: {}]
  %s5 = inlined_call_operand.vmem [shape: bf16[32,32], index: 5, kind: input, shape index: {}]
  %s6 = inlined_call_operand.vmem [shape: bf16[32,32], index: 6, kind: input, shape index: {}]
  %s7 = inlined_call_operand.vmem [shape: f32[1,32], index: 7, kind: input, shape index: {}]
  %s8 = inlined_call_operand.vmem [shape: f32[1,32], index: 8, kind: input, shape index: {}]
  %s9 = inlined_call_operand.vmem [shape: f32[1,32], index: 9, kind: input, shape index: {}]
  %s10 = inlined_call_operand.hbm [shape: bf16[4,8,32], index: 10, kind: input, shape index: {}]
  %s11 = inlined_call_operand.vmem [shape: f32[1,32], index: 11, kind: input, shape index: {}]
  %s12 = inlined_call_operand.hbm [shape: bf16[32,64], index: 12, kind: input, shape index: {}]
  %s13 = inlined_call_operand.vmem [shape: f32[1,64], index: 13, kind: input, shape index: {}]
  %s14 = inlined_call_operand.vmem [shape: bf16[64,32], index: 14, kind: input, shape index: {}]
  %s15 = inlined_call_operand.vmem [shape: f32[1,32], index: 15, kind: input, shape index: {}]
  %s16 = inlined_call_operand.vmem [shape: f32[1,32], index: 16, kind: input, shape index: {}]
  %s17 = inlined_call_operand.vmem [shape: f32[1,32], index: 17, kind: input, shape index: {}]
  %s18 = inlined_call_operand.hbm [shape: f32[2,8,32], index: 18, kind: output, shape index: {0}]
  %s19 = inlined_call_operand.hbm [shape: f32[2,8,8], index: 19, kind: output, shape index: {1}]
  %s20 = inlined_call_operand.hbm [shape: f32[2,8,8], index: 20, kind: output, shape index: {2}]
  %21 = xla_tuple %s18, %s19, %s20
  %s22 = sld [smem:[#allocation0]]
  $region141: #{tpu_custom_call.1} parent=0
    _
  %s24 = ssub.s32 1, %s22
  %s25 = scalar_select 0, %s24, %s22
  $region1: #{tpu_custom_call.1} parent=0
    #allocation2 [shape = 'u8[4096]{0}', space=vmem, size = 0x1000, scoped, tag = 'input window, operand 0']
    #allocation3 [shape = 's32[2]{0}', space=sflag, size = 0x8, scoped, tag = 'scoped memory for tpu_custom_call.1']
    #allocation4 [shape = 's32[2]{0}', space=sflag, size = 0x8, scoped, tag = 'scoped memory for tpu_custom_call.1']
    #allocation5 [shape = 'u8[4096]{0}', space=vmem, size = 0x1000, scoped, tag = 'input window, operand 1']
    #allocation6 [shape = 's32[2]{0}', space=sflag, size = 0x8, scoped, tag = 'scoped memory for tpu_custom_call.1']
    #allocation7 [shape = 'u8[1024]{0}', space=vmem, size = 0x400, scoped, tag = 'input window, operand 2']
    #allocation8 [shape = 'u8[8192]{0}', space=vmem, size = 0x2000, scoped, tag = 'input window, operand 10, single buffered']
    #allocation9 [shape = 's32[1]{0}', space=sflag, size = 0x4, scoped, tag = 'scoped memory for tpu_custom_call.1']
    #allocation10 [shape = 'u8[8192]{0}', space=vmem, size = 0x2000, scoped, tag = 'input window, operand 12, single buffered']
    #allocation11 [shape = 'u8[8192]{0}', space=vmem, size = 0x2000, scoped, tag = 'output window, operand 0']
    #allocation12 [shape = 'u8[8192]{0}', space=vmem, size = 0x2000, scoped, tag = 'output window, operand 1']
    #allocation13 [shape = 's32[2]{0}', space=sflag, size = 0x8, scoped, tag = 'scoped memory for tpu_custom_call.1']
    #allocation14 [shape = 'u8[8192]{0}', space=vmem, size = 0x2000, scoped, tag = 'output window, operand 2']
    %26 = vsyncpa [#allocation3], 0
    %s27 = scalar_lea.sflag [#allocation3], 1
    %28 = vsyncpa %s27, 0
    %29 = vsyncpa [#allocation6], 0
    %s30 = scalar_lea.sflag [#allocation6], 1
    %31 = vsyncpa %s30, 0
    %32 = vsyncpa [#allocation9], 0
    %33 = vsyncpa [#allocation4], 0
    %s34 = scalar_lea.sflag [#allocation4], 1
    %35 = vsyncpa %s34, 0
    %36 = vsyncpa [#allocation13], 0
    %s37 = scalar_lea.sflag [#allocation13], 1
    %38 = vsyncpa %s37, 0
    loop: start=0, step=1, limit=4
    $region2: #{tpu_custom_call.1} parent=1 // loop_pre_header
      _
    $region3: #{tpu_custom_call.1} parent=1 // loop_header
      %s40 = sphi 0, %s44
      %p41 = scmp.ge.s32.totalorder %s40, 4
      %s50 = sphi 0, %s52
      %s53 = sphi 0, %s50
      %s54 = sphi 0, %s53
      %s70 = sphi 0, %s54
      %s76 = sphi 0, %s78
      %s79 = sphi 0, %s76
      %s80 = sphi 0, %s79
      %s96 = sphi 0, %s80
      %s102 = sphi 0, %s104
      %s105 = sphi 0, %s102
      %s106 = sphi 0, %s105
      %s122 = sphi 0, %s106
      %s128 = sphi 0, %s130
      %s131 = sphi 0, %s128
      %s132 = sphi 0, %s131
      %s148 = sphi 0, %s132
      %s152 = sphi 0, %s152
      %s154 = sphi 0, %s152
      %s155 = sphi 0, %s154
      %s169 = sphi 0, %s155
      %s173 = sphi 0, %s173
      %s175 = sphi 0, %s173
      %s176 = sphi 0, %s175
      %s190 = sphi 0, %s176
      %s194 = sphi 0, %s194
      %s196 = sphi 0, %s194
      %s197 = sphi 0, %s196
      %s211 = sphi 0, %s197
      %s215 = sphi 0, %s215
      %s217 = sphi 0, %s215
      %s218 = sphi 0, %s217
      %s232 = sphi 0, %s218
      %s236 = sphi 0, %s236
      %s238 = sphi 0, %s236
      %s239 = sphi 0, %s238
      %s253 = sphi 0, %s239
      %s257 = sphi 0, %s257
      %s259 = sphi 0, %s257
      %s260 = sphi 0, %s259
      %s274 = sphi 0, %s260
      %s278 = sphi 0, %s278
      %s280 = sphi 0, %s278
      %s281 = sphi 0, %s280
      %s295 = sphi 0, %s281
      %s299 = sphi 0, %s299
      %s301 = sphi 0, %s299
      %s302 = sphi 0, %s301
      %s316 = sphi 0, %s302
      %s320 = sphi 0, %s320
      %s322 = sphi 0, %s320
      %s323 = sphi 0, %s322
      %s337 = sphi 0, %s323
      %s341 = sphi 0, %s341
      %s343 = sphi 0, %s341
      %s344 = sphi 0, %s343
      %s358 = sphi 0, %s344
      %s362 = sphi 0, %s362
      %s364 = sphi 0, %s362
      %s365 = sphi 0, %s364
      %s379 = sphi 0, %s365
      %s383 = sphi 0, %s383
      %s385 = sphi 0, %s383
      %s386 = sphi 0, %s385
      %s400 = sphi 0, %s386
      %s404 = sphi 0, %s404
      %s406 = sphi 0, %s404
      %s407 = sphi 0, %s406
      %s421 = sphi 0, %s407
      %s425 = sphi 0, %s425
      %s427 = sphi 0, %s425
      %s428 = sphi 0, %s427
      %s442 = sphi 0, %s428
      %s448 = sphi 0, %s450
      %s451 = sphi 0, %s448
      %s452 = sphi 0, %s451
      %s468 = sphi 0, %s452
      %s474 = sphi 0, %s476
      %s477 = sphi 0, %s474
      %s478 = sphi 0, %s477
      %s494 = sphi 0, %s478
      %s500 = sphi 0, %s502
      %s503 = sphi 0, %s500
      %s504 = sphi 0, %s503
      %s520 = sphi 0, %s504
    $region4: #{tpu_custom_call.1} parent=1 // loop_header_branch
      %43 = sbr.rel (%p41) target = $region8
    $region5: #{tpu_custom_call.1} parent=1 // loop_body
      %s45 = ssub.s32 %s40, 1
      %s46 = ssub.s32 %s40, 2
      %s47 = sadd.s32 %s40, 1
      %s48 = ssub.s32 %s40, %s47
      %p49 = scmp.eq.s32.totalorder %s48, 0
      %s51 = sadd.s32 %s50, 1
      %s52 = scalar_select %p49, %s50, %s51
      %p55 = pneg %p49
      %p56 = scmp.eq.s32.totalorder %s40, 1
      %p57 = por %p55, %p56
      %p58 = scmp.ne.s32.totalorder %s50, %s53
      %p59 = scmp.eq.s32.totalorder %s40, 0
      %p60 = por %p58, %p59
      %p61 = scmp.ne.s32.totalorder %s50, %s53
      %p62 = scmp.eq.s32.totalorder %s45, 1
      %p63 = por %p61, %p62
      %p64 = scmp.ne.s32.totalorder %s53, %s54
      %p65 = scmp.eq.s32.totalorder %s45, 0
      %p66 = por %p64, %p65
      %p67 = scmp.ne.s32.totalorder %s53, %s54
      %p68 = scmp.eq.s32.totalorder %s46, 1
      %p69 = por %p67, %p68
      %p71 = scmp.ne.s32.totalorder %s54, %s70
      %p72 = scmp.eq.s32.totalorder %s46, 0
      %p73 = por %p71, %p72
      %s74 = ssub.s32 %s40, %s47
      %p75 = scmp.eq.s32.totalorder %s74, 0
      %s77 = sadd.s32 %s76, 1
      %s78 = scalar_select %p75, %s76, %s77
      %p81 = pneg %p75
      %p82 = scmp.eq.s32.totalorder %s40, 1
      %p83 = por %p81, %p82
      %p84 = scmp.ne.s32.totalorder %s76, %s79
      %p85 = scmp.eq.s32.totalorder %s40, 0
      %p86 = por %p84, %p85
      %p87 = scmp.ne.s32.totalorder %s76, %s79
      %p88 = scmp.eq.s32.totalorder %s45, 1
      %p89 = por %p87, %p88
      %p90 = scmp.ne.s32.totalorder %s79, %s80
      %p91 = scmp.eq.s32.totalorder %s45, 0
      %p92 = por %p90, %p91
      %p93 = scmp.ne.s32.totalorder %s79, %s80
      %p94 = scmp.eq.s32.totalorder %s46, 1
      %p95 = por %p93, %p94
      %p97 = scmp.ne.s32.totalorder %s80, %s96
      %p98 = scmp.eq.s32.totalorder %s46, 0
      %p99 = por %p97, %p98
      %s100 = ssub.s32 %s40, %s47
      %p101 = scmp.eq.s32.totalorder %s100, 0
      %s103 = sadd.s32 %s102, 1
      %s104 = scalar_select %p101, %s102, %s103
      %p107 = pneg %p101
      %p108 = scmp.eq.s32.totalorder %s40, 1
      %p109 = por %p107, %p108
      %p110 = scmp.ne.s32.totalorder %s102, %s105
      %p111 = scmp.eq.s32.totalorder %s40, 0
      %p112 = por %p110, %p111
      %p113 = scmp.ne.s32.totalorder %s102, %s105
      %p114 = scmp.eq.s32.totalorder %s45, 1
      %p115 = por %p113, %p114
      %p116 = scmp.ne.s32.totalorder %s105, %s106
      %p117 = scmp.eq.s32.totalorder %s45, 0
      %p118 = por %p116, %p117
      %p119 = scmp.ne.s32.totalorder %s105, %s106
      %p120 = scmp.eq.s32.totalorder %s46, 1
      %p121 = por %p119, %p120
      %p123 = scmp.ne.s32.totalorder %s106, %s122
      %p124 = scmp.eq.s32.totalorder %s46, 0
      %p125 = por %p123, %p124
      %s126 = ssub.s32 %s40, %s47
      %p127 = scmp.eq.s32.totalorder %s126, 0
      %s129 = sadd.s32 %s128, 1
      %s130 = scalar_select %p127, %s128, %s129
      %p133 = pneg %p127
      %p134 = scmp.eq.s32.totalorder %s40, 1
      %p135 = por %p133, %p134
      %p136 = scmp.ne.s32.totalorder %s128, %s131
      %p137 = scmp.eq.s32.totalorder %s40, 0
      %p138 = por %p136, %p137
      %p139 = scmp.ne.s32.totalorder %s128, %s131
      %p140 = scmp.eq.s32.totalorder %s45, 1
      %p141 = por %p139, %p140
      %p142 = scmp.ne.s32.totalorder %s131, %s132
      %p143 = scmp.eq.s32.totalorder %s45, 0
      %p144 = por %p142, %p143
      %p145 = scmp.ne.s32.totalorder %s131, %s132
      %p146 = scmp.eq.s32.totalorder %s46, 1
      %p147 = por %p145, %p146
      %p149 = scmp.ne.s32.totalorder %s132, %s148
      %p150 = scmp.eq.s32.totalorder %s46, 0
      %p151 = por %p149, %p150
      %s153 = sadd.s32 %s152, 1
      %p156 = scmp.eq.s32.totalorder %s40, 1
      %p157 = scmp.ne.s32.totalorder %s152, %s154
      %p158 = scmp.eq.s32.totalorder %s40, 0
      %p159 = por %p157, %p158
      %p160 = scmp.ne.s32.totalorder %s152, %s154
      %p161 = scmp.eq.s32.totalorder %s45, 1
      %p162 = por %p160, %p161
      %p163 = scmp.ne.s32.totalorder %s154, %s155
      %p164 = scmp.eq.s32.totalorder %s45, 0
      %p165 = por %p163, %p164
      %p166 = scmp.ne.s32.totalorder %s154, %s155
      %p167 = scmp.eq.s32.totalorder %s46, 1
      %p168 = por %p166, %p167
      %p170 = scmp.ne.s32.totalorder %s155, %s169
      %p171 = scmp.eq.s32.totalorder %s46, 0
      %p172 = por %p170, %p171
      %s174 = sadd.s32 %s173, 1
      %p177 = scmp.eq.s32.totalorder %s40, 1
      %p178 = scmp.ne.s32.totalorder %s173, %s175
      %p179 = scmp.eq.s32.totalorder %s40, 0
      %p180 = por %p178, %p179
      %p181 = scmp.ne.s32.totalorder %s173, %s175
      %p182 = scmp.eq.s32.totalorder %s45, 1
      %p183 = por %p181, %p182
      %p184 = scmp.ne.s32.totalorder %s175, %s176
      %p185 = scmp.eq.s32.totalorder %s45, 0
      %p186 = por %p184, %p185
      %p187 = scmp.ne.s32.totalorder %s175, %s176
      %p188 = scmp.eq.s32.totalorder %s46, 1
      %p189 = por %p187, %p188
      %p191 = scmp.ne.s32.totalorder %s176, %s190
      %p192 = scmp.eq.s32.totalorder %s46, 0
      %p193 = por %p191, %p192
      %s195 = sadd.s32 %s194, 1
      %p198 = scmp.eq.s32.totalorder %s40, 1
      %p199 = scmp.ne.s32.totalorder %s194, %s196
      %p200 = scmp.eq.s32.totalorder %s40, 0
      %p201 = por %p199, %p200
      %p202 = scmp.ne.s32.totalorder %s194, %s196
      %p203 = scmp.eq.s32.totalorder %s45, 1
      %p204 = por %p202, %p203
      %p205 = scmp.ne.s32.totalorder %s196, %s197
      %p206 = scmp.eq.s32.totalorder %s45, 0
      %p207 = por %p205, %p206
      %p208 = scmp.ne.s32.totalorder %s196, %s197
      %p209 = scmp.eq.s32.totalorder %s46, 1
      %p210 = por %p208, %p209
      %p212 = scmp.ne.s32.totalorder %s197, %s211
      %p213 = scmp.eq.s32.totalorder %s46, 0
      %p214 = por %p212, %p213
      %s216 = sadd.s32 %s215, 1
      %p219 = scmp.eq.s32.totalorder %s40, 1
      %p220 = scmp.ne.s32.totalorder %s215, %s217
      %p221 = scmp.eq.s32.totalorder %s40, 0
      %p222 = por %p220, %p221
      %p223 = scmp.ne.s32.totalorder %s215, %s217
      %p224 = scmp.eq.s32.totalorder %s45, 1
      %p225 = por %p223, %p224
      %p226 = scmp.ne.s32.totalorder %s217, %s218
      %p227 = scmp.eq.s32.totalorder %s45, 0
      %p228 = por %p226, %p227
      %p229 = scmp.ne.s32.totalorder %s217, %s218
      %p230 = scmp.eq.s32.totalorder %s46, 1
      %p231 = por %p229, %p230
      %p233 = scmp.ne.s32.totalorder %s218, %s232
      %p234 = scmp.eq.s32.totalorder %s46, 0
      %p235 = por %p233, %p234
      %s237 = sadd.s32 %s236, 1
      %p240 = scmp.eq.s32.totalorder %s40, 1
      %p241 = scmp.ne.s32.totalorder %s236, %s238
      %p242 = scmp.eq.s32.totalorder %s40, 0
      %p243 = por %p241, %p242
      %p244 = scmp.ne.s32.totalorder %s236, %s238
      %p245 = scmp.eq.s32.totalorder %s45, 1
      %p246 = por %p244, %p245
      %p247 = scmp.ne.s32.totalorder %s238, %s239
      %p248 = scmp.eq.s32.totalorder %s45, 0
      %p249 = por %p247, %p248
      %p250 = scmp.ne.s32.totalorder %s238, %s239
      %p251 = scmp.eq.s32.totalorder %s46, 1
      %p252 = por %p250, %p251
      %p254 = scmp.ne.s32.totalorder %s239, %s253
      %p255 = scmp.eq.s32.totalorder %s46, 0
      %p256 = por %p254, %p255
      %s258 = sadd.s32 %s257, 1
      %p261 = scmp.eq.s32.totalorder %s40, 1
      %p262 = scmp.ne.s32.totalorder %s257, %s259
      %p263 = scmp.eq.s32.totalorder %s40, 0
      %p264 = por %p262, %p263
      %p265 = scmp.ne.s32.totalorder %s257, %s259
      %p266 = scmp.eq.s32.totalorder %s45, 1
      %p267 = por %p265, %p266
      %p268 = scmp.ne.s32.totalorder %s259, %s260
      %p269 = scmp.eq.s32.totalorder %s45, 0
      %p270 = por %p268, %p269
      %p271 = scmp.ne.s32.totalorder %s259, %s260
      %p272 = scmp.eq.s32.totalorder %s46, 1
      %p273 = por %p271, %p272
      %p275 = scmp.ne.s32.totalorder %s260, %s274
      %p276 = scmp.eq.s32.totalorder %s46, 0
      %p277 = por %p275, %p276
      %s279 = sadd.s32 %s278, 1
      %p282 = scmp.eq.s32.totalorder %s40, 1
      %p283 = scmp.ne.s32.totalorder %s278, %s280
      %p284 = scmp.eq.s32.totalorder %s40, 0
      %p285 = por %p283, %p284
      %p286 = scmp.ne.s32.totalorder %s278, %s280
      %p287 = scmp.eq.s32.totalorder %s45, 1
      %p288 = por %p286, %p287
      %p289 = scmp.ne.s32.totalorder %s280, %s281
      %p290 = scmp.eq.s32.totalorder %s45, 0
      %p291 = por %p289, %p290
      %p292 = scmp.ne.s32.totalorder %s280, %s281
      %p293 = scmp.eq.s32.totalorder %s46, 1
      %p294 = por %p292, %p293
      %p296 = scmp.ne.s32.totalorder %s281, %s295
      %p297 = scmp.eq.s32.totalorder %s46, 0
      %p298 = por %p296, %p297
      %s300 = sadd.s32 %s299, 1
      %p303 = scmp.eq.s32.totalorder %s40, 1
      %p304 = scmp.ne.s32.totalorder %s299, %s301
      %p305 = scmp.eq.s32.totalorder %s40, 0
      %p306 = por %p304, %p305
      %p307 = scmp.ne.s32.totalorder %s299, %s301
      %p308 = scmp.eq.s32.totalorder %s45, 1
      %p309 = por %p307, %p308
      %p310 = scmp.ne.s32.totalorder %s301, %s302
      %p311 = scmp.eq.s32.totalorder %s45, 0
      %p312 = por %p310, %p311
      %p313 = scmp.ne.s32.totalorder %s301, %s302
      %p314 = scmp.eq.s32.totalorder %s46, 1
      %p315 = por %p313, %p314
      %p317 = scmp.ne.s32.totalorder %s302, %s316
      %p318 = scmp.eq.s32.totalorder %s46, 0
      %p319 = por %p317, %p318
      %s321 = sadd.s32 %s320, 1
      %p324 = scmp.eq.s32.totalorder %s40, 1
      %p325 = scmp.ne.s32.totalorder %s320, %s322
      %p326 = scmp.eq.s32.totalorder %s40, 0
      %p327 = por %p325, %p326
      %p328 = scmp.ne.s32.totalorder %s320, %s322
      %p329 = scmp.eq.s32.totalorder %s45, 1
      %p330 = por %p328, %p329
      %p331 = scmp.ne.s32.totalorder %s322, %s323
      %p332 = scmp.eq.s32.totalorder %s45, 0
      %p333 = por %p331, %p332
      %p334 = scmp.ne.s32.totalorder %s322, %s323
      %p335 = scmp.eq.s32.totalorder %s46, 1
      %p336 = por %p334, %p335
      %p338 = scmp.ne.s32.totalorder %s323, %s337
      %p339 = scmp.eq.s32.totalorder %s46, 0
      %p340 = por %p338, %p339
      %s342 = sadd.s32 %s341, 1
      %p345 = scmp.eq.s32.totalorder %s40, 1
      %p346 = scmp.ne.s32.totalorder %s341, %s343
      %p347 = scmp.eq.s32.totalorder %s40, 0
      %p348 = por %p346, %p347
      %p349 = scmp.ne.s32.totalorder %s341, %s343
      %p350 = scmp.eq.s32.totalorder %s45, 1
      %p351 = por %p349, %p350
      %p352 = scmp.ne.s32.totalorder %s343, %s344
      %p353 = scmp.eq.s32.totalorder %s45, 0
      %p354 = por %p352, %p353
      %p355 = scmp.ne.s32.totalorder %s343, %s344
      %p356 = scmp.eq.s32.totalorder %s46, 1
      %p357 = por %p355, %p356
      %p359 = scmp.ne.s32.totalorder %s344, %s358
      %p360 = scmp.eq.s32.totalorder %s46, 0
      %p361 = por %p359, %p360
      %s363 = sadd.s32 %s362, 1
      %p366 = scmp.eq.s32.totalorder %s40, 1
      %p367 = scmp.ne.s32.totalorder %s362, %s364
      %p368 = scmp.eq.s32.totalorder %s40, 0
      %p369 = por %p367, %p368
      %p370 = scmp.ne.s32.totalorder %s362, %s364
      %p371 = scmp.eq.s32.totalorder %s45, 1
      %p372 = por %p370, %p371
      %p373 = scmp.ne.s32.totalorder %s364, %s365
      %p374 = scmp.eq.s32.totalorder %s45, 0
      %p375 = por %p373, %p374
      %p376 = scmp.ne.s32.totalorder %s364, %s365
      %p377 = scmp.eq.s32.totalorder %s46, 1
      %p378 = por %p376, %p377
      %p380 = scmp.ne.s32.totalorder %s365, %s379
      %p381 = scmp.eq.s32.totalorder %s46, 0
      %p382 = por %p380, %p381
      %s384 = sadd.s32 %s383, 1
      %p387 = scmp.eq.s32.totalorder %s40, 1
      %p388 = scmp.ne.s32.totalorder %s383, %s385
      %p389 = scmp.eq.s32.totalorder %s40, 0
      %p390 = por %p388, %p389
      %p391 = scmp.ne.s32.totalorder %s383, %s385
      %p392 = scmp.eq.s32.totalorder %s45, 1
      %p393 = por %p391, %p392
      %p394 = scmp.ne.s32.totalorder %s385, %s386
      %p395 = scmp.eq.s32.totalorder %s45, 0
      %p396 = por %p394, %p395
      %p397 = scmp.ne.s32.totalorder %s385, %s386
      %p398 = scmp.eq.s32.totalorder %s46, 1
      %p399 = por %p397, %p398
      %p401 = scmp.ne.s32.totalorder %s386, %s400
      %p402 = scmp.eq.s32.totalorder %s46, 0
      %p403 = por %p401, %p402
      %s405 = sadd.s32 %s404, 1
      %p408 = scmp.eq.s32.totalorder %s40, 1
      %p409 = scmp.ne.s32.totalorder %s404, %s406
      %p410 = scmp.eq.s32.totalorder %s40, 0
      %p411 = por %p409, %p410
      %p412 = scmp.ne.s32.totalorder %s404, %s406
      %p413 = scmp.eq.s32.totalorder %s45, 1
      %p414 = por %p412, %p413
      %p415 = scmp.ne.s32.totalorder %s406, %s407
      %p416 = scmp.eq.s32.totalorder %s45, 0
      %p417 = por %p415, %p416
      %p418 = scmp.ne.s32.totalorder %s406, %s407
      %p419 = scmp.eq.s32.totalorder %s46, 1
      %p420 = por %p418, %p419
      %p422 = scmp.ne.s32.totalorder %s407, %s421
      %p423 = scmp.eq.s32.totalorder %s46, 0
      %p424 = por %p422, %p423
      %s426 = sadd.s32 %s425, 1
      %p429 = scmp.eq.s32.totalorder %s40, 1
      %p430 = scmp.ne.s32.totalorder %s425, %s427
      %p431 = scmp.eq.s32.totalorder %s40, 0
      %p432 = por %p430, %p431
      %p433 = scmp.ne.s32.totalorder %s425, %s427
      %p434 = scmp.eq.s32.totalorder %s45, 1
      %p435 = por %p433, %p434
      %p436 = scmp.ne.s32.totalorder %s427, %s428
      %p437 = scmp.eq.s32.totalorder %s45, 0
      %p438 = por %p436, %p437
      %p439 = scmp.ne.s32.totalorder %s427, %s428
      %p440 = scmp.eq.s32.totalorder %s46, 1
      %p441 = por %p439, %p440
      %p443 = scmp.ne.s32.totalorder %s428, %s442
      %p444 = scmp.eq.s32.totalorder %s46, 0
      %p445 = por %p443, %p444
      %s446 = ssub.s32 %s40, %s47
      %p447 = scmp.eq.s32.totalorder %s446, 0
      %s449 = sadd.s32 %s448, 1
      %s450 = scalar_select %p447, %s448, %s449
      %p453 = pneg %p447
      %p454 = scmp.eq.s32.totalorder %s40, 1
      %p455 = por %p453, %p454
      %p456 = scmp.ne.s32.totalorder %s448, %s451
      %p457 = scmp.eq.s32.totalorder %s40, 0
      %p458 = por %p456, %p457
      %p459 = scmp.ne.s32.totalorder %s448, %s451
      %p460 = scmp.eq.s32.totalorder %s45, 1
      %p461 = por %p459, %p460
      %p462 = scmp.ne.s32.totalorder %s451, %s452
      %p463 = scmp.eq.s32.totalorder %s45, 0
      %p464 = por %p462, %p463
      %p465 = scmp.ne.s32.totalorder %s451, %s452
      %p466 = scmp.eq.s32.totalorder %s46, 1
      %p467 = por %p465, %p466
      %p469 = scmp.ne.s32.totalorder %s452, %s468
      %p470 = scmp.eq.s32.totalorder %s46, 0
      %p471 = por %p469, %p470
      %s472 = ssub.s32 %s40, %s47
      %p473 = scmp.eq.s32.totalorder %s472, 0
      %s475 = sadd.s32 %s474, 1
      %s476 = scalar_select %p473, %s474, %s475
      %p479 = pneg %p473
      %p480 = scmp.eq.s32.totalorder %s40, 1
      %p481 = por %p479, %p480
      %p482 = scmp.ne.s32.totalorder %s474, %s477
      %p483 = scmp.eq.s32.totalorder %s40, 0
      %p484 = por %p482, %p483
      %p485 = scmp.ne.s32.totalorder %s474, %s477
      %p486 = scmp.eq.s32.totalorder %s45, 1
      %p487 = por %p485, %p486
      %p488 = scmp.ne.s32.totalorder %s477, %s478
      %p489 = scmp.eq.s32.totalorder %s45, 0
      %p490 = por %p488, %p489
      %p491 = scmp.ne.s32.totalorder %s477, %s478
      %p492 = scmp.eq.s32.totalorder %s46, 1
      %p493 = por %p491, %p492
      %p495 = scmp.ne.s32.totalorder %s478, %s494
      %p496 = scmp.eq.s32.totalorder %s46, 0
      %p497 = por %p495, %p496
      %s498 = ssub.s32 %s40, %s47
      %p499 = scmp.eq.s32.totalorder %s498, 0
      %s501 = sadd.s32 %s500, 1
      %s502 = scalar_select %p499, %s500, %s501
      %p505 = pneg %p499
      %p506 = scmp.eq.s32.totalorder %s40, 1
      %p507 = por %p505, %p506
      %p508 = scmp.ne.s32.totalorder %s500, %s503
      %p509 = scmp.eq.s32.totalorder %s40, 0
      %p510 = por %p508, %p509
      %p511 = scmp.ne.s32.totalorder %s500, %s503
      %p512 = scmp.eq.s32.totalorder %s45, 1
      %p513 = por %p511, %p512
      %p514 = scmp.ne.s32.totalorder %s503, %s504
      %p515 = scmp.eq.s32.totalorder %s45, 0
      %p516 = por %p514, %p515
      %p517 = scmp.ne.s32.totalorder %s503, %s504
      %p518 = scmp.eq.s32.totalorder %s46, 1
      %p519 = por %p517, %p518
      %p521 = scmp.ne.s32.totalorder %s504, %s520
      %p522 = scmp.eq.s32.totalorder %s46, 0
      %p523 = por %p521, %p522
      %p524 = scmp.le.s32.totalorder 1, %s40
      %p525 = scmp.lt.s32.totalorder %s40, 3
      %p526 = pnand %p524, %p525
      %p527 = pneg %p526
      // Predicated region
      $region9: #{tpu_custom_call.1} parent=5 // pred_check
        _
      $region10: #{tpu_custom_call.1} parent=5 // pred_check_branch
        %529 = sbr.rel (%p526) target = $region12
      $region11: #{tpu_custom_call.1} parent=5 // pred_region
        %s530 = ssub.s32 %s40, 1
        // Predicated region
        $region13: #{tpu_custom_call.1} parent=11 // pred_check
          %p531 = pneg %p165
        $region14: #{tpu_custom_call.1} parent=11 // pred_check_branch
          %533 = sbr.rel (%p531) target = $region16
        $region15: #{tpu_custom_call.1} parent=11 // pred_region
          _
        $region16: #{tpu_custom_call.1} parent=11 // pred_fallthru
          _
        // Predicated region
        $region17: #{tpu_custom_call.1} parent=11 // pred_check
          %p534 = pneg %p186
        $region18: #{tpu_custom_call.1} parent=11 // pred_check_branch
          %536 = sbr.rel (%p534) target = $region20
        $region19: #{tpu_custom_call.1} parent=11 // pred_region
          _
        $region20: #{tpu_custom_call.1} parent=11 // pred_fallthru
          _
        // Predicated region
        $region21: #{tpu_custom_call.1} parent=11 // pred_check
          %p537 = pneg %p207
        $region22: #{tpu_custom_call.1} parent=11 // pred_check_branch
          %539 = sbr.rel (%p537) target = $region24
        $region23: #{tpu_custom_call.1} parent=11 // pred_region
          _
        $region24: #{tpu_custom_call.1} parent=11 // pred_fallthru
          _
        // Predicated region
        $region25: #{tpu_custom_call.1} parent=11 // pred_check
          %p540 = pneg %p228
        $region26: #{tpu_custom_call.1} parent=11 // pred_check_branch
          %542 = sbr.rel (%p540) target = $region28
        $region27: #{tpu_custom_call.1} parent=11 // pred_region
          _
        $region28: #{tpu_custom_call.1} parent=11 // pred_fallthru
          _
        // Predicated region
        $region29: #{tpu_custom_call.1} parent=11 // pred_check
          %p543 = pneg %p249
        $region30: #{tpu_custom_call.1} parent=11 // pred_check_branch
          %545 = sbr.rel (%p543) target = $region32
        $region31: #{tpu_custom_call.1} parent=11 // pred_region
          _
        $region32: #{tpu_custom_call.1} parent=11 // pred_fallthru
          _
        // Predicated region
        $region33: #{tpu_custom_call.1} parent=11 // pred_check
          %p546 = pneg %p270
        $region34: #{tpu_custom_call.1} parent=11 // pred_check_branch
          %548 = sbr.rel (%p546) target = $region36
        $region35: #{tpu_custom_call.1} parent=11 // pred_region
          _
        $region36: #{tpu_custom_call.1} parent=11 // pred_fallthru
          _
        // Predicated region
        $region37: #{tpu_custom_call.1} parent=11 // pred_check
          %p549 = pneg %p291
        $region38: #{tpu_custom_call.1} parent=11 // pred_check_branch
          %551 = sbr.rel (%p549) target = $region40
        $region39: #{tpu_custom_call.1} parent=11 // pred_region
          %553 = vsyncadd [#allocation9], 0
          %s554 = sshll.u32 %s10, 4
          %s555 = int_to_ptr.hbm [resolvable:$true] %s554
          %s556 = sshll.u32 [#allocation8], 4
          %s557 = int_to_ptr.vmem [resolvable:$true] %s556
          %562 = dma.hbm_to_vmem [thread:$0]  %s555, 256, %s557, [#allocation9], 64, 64, 4
        $region40: #{tpu_custom_call.1} parent=11 // pred_fallthru
          _
        // Predicated region
        $region41: #{tpu_custom_call.1} parent=11 // pred_check
          %p563 = pneg %p312
        $region42: #{tpu_custom_call.1} parent=11 // pred_check_branch
          %565 = sbr.rel (%p563) target = $region44
        $region43: #{tpu_custom_call.1} parent=11 // pred_region
          _
        $region44: #{tpu_custom_call.1} parent=11 // pred_fallthru
          _
        // Predicated region
        $region45: #{tpu_custom_call.1} parent=11 // pred_check
          %p566 = pneg %p333
        $region46: #{tpu_custom_call.1} parent=11 // pred_check_branch
          %568 = sbr.rel (%p566) target = $region48
        $region47: #{tpu_custom_call.1} parent=11 // pred_region
          %570 = vsyncadd [#allocation9], 0
          %s571 = sshll.u32 %s12, 4
          %s572 = int_to_ptr.hbm [resolvable:$true] %s571
          %s573 = sshll.u32 [#allocation10], 4
          %s574 = int_to_ptr.vmem [resolvable:$true] %s573
          %579 = dma.hbm_to_vmem [thread:$0]  %s572, 256, %s574, [#allocation9], 64, 64, 4
        $region48: #{tpu_custom_call.1} parent=11 // pred_fallthru
          _
        // Predicated region
        $region49: #{tpu_custom_call.1} parent=11 // pred_check
          %p580 = pneg %p354
        $region50: #{tpu_custom_call.1} parent=11 // pred_check_branch
          %582 = sbr.rel (%p580) target = $region52
        $region51: #{tpu_custom_call.1} parent=11 // pred_region
          _
        $region52: #{tpu_custom_call.1} parent=11 // pred_fallthru
          _
        // Predicated region
        $region53: #{tpu_custom_call.1} parent=11 // pred_check
          %p583 = pneg %p375
        $region54: #{tpu_custom_call.1} parent=11 // pred_check_branch
          %585 = sbr.rel (%p583) target = $region56
        $region55: #{tpu_custom_call.1} parent=11 // pred_region
          _
        $region56: #{tpu_custom_call.1} parent=11 // pred_fallthru
          _
        // Predicated region
        $region57: #{tpu_custom_call.1} parent=11 // pred_check
          %p586 = pneg %p396
        $region58: #{tpu_custom_call.1} parent=11 // pred_check_branch
          %588 = sbr.rel (%p586) target = $region60
        $region59: #{tpu_custom_call.1} parent=11 // pred_region
          _
        $region60: #{tpu_custom_call.1} parent=11 // pred_fallthru
          _
        // Predicated region
        $region61: #{tpu_custom_call.1} parent=11 // pred_check
          %p589 = pneg %p417
        $region62: #{tpu_custom_call.1} parent=11 // pred_check_branch
          %591 = sbr.rel (%p589) target = $region64
        $region63: #{tpu_custom_call.1} parent=11 // pred_region
          _
        $region64: #{tpu_custom_call.1} parent=11 // pred_fallthru
          _
        // Predicated region
        $region65: #{tpu_custom_call.1} parent=11 // pred_check
          %p592 = pneg %p438
        $region66: #{tpu_custom_call.1} parent=11 // pred_check_branch
          %594 = sbr.rel (%p592) target = $region68
        $region67: #{tpu_custom_call.1} parent=11 // pred_region
          _
        $region68: #{tpu_custom_call.1} parent=11 // pred_fallthru
          _
      $region12: #{tpu_custom_call.1} parent=5 // pred_fallthru
        _
      %p595 = scmp.lt.s32.totalorder %s40, 2
      // Predicated region
      $region69: #{tpu_custom_call.1} parent=5 // pred_check
        %p596 = pneg %p595
      $region70: #{tpu_custom_call.1} parent=5 // pred_check_branch
        %598 = sbr.rel (%p596) target = $region72
      $region71: #{tpu_custom_call.1} parent=5 // pred_region
        // Predicated region
        $region73: #{tpu_custom_call.1} parent=71 // pred_check
          %p599 = pneg %p60
        $region74: #{tpu_custom_call.1} parent=71 // pred_check_branch
          %601 = sbr.rel (%p599) target = $region76
        $region75: #{tpu_custom_call.1} parent=71 // pred_region
          %s602 = sand.u32 %s50, 1
          %s603 = scalar_lea.sflag [#allocation3], %s602
          %s604 = sand.u32 %s50, 1
          %s605 = smul.addr %s604, 4
          %s606 = scalar_lea.vmem [#allocation2], %s605
          %608 = vsyncadd %s603, 0
          %s609 = smul.addr %s40, 4
          %s610 = scalar_lea.hbm %s0, %s609
          %s612 = sshll.u32 %s610, 4
          %s613 = int_to_ptr.hbm [resolvable:$true] %s612
          %s614 = sshll.u32 %s606, 4
          %s615 = int_to_ptr.vmem [resolvable:$true] %s614
          %617 = dma.hbm_to_vmem [thread:$0]  %s613, 64, %s615, %s603
        $region76: #{tpu_custom_call.1} parent=71 // pred_fallthru
          _
        // Predicated region
        $region77: #{tpu_custom_call.1} parent=71 // pred_check
          %p618 = pneg %p86
        $region78: #{tpu_custom_call.1} parent=71 // pred_check_branch
          %620 = sbr.rel (%p618) target = $region80
        $region79: #{tpu_custom_call.1} parent=71 // pred_region
          %s621 = sand.u32 %s40, 1
          %s622 = scalar_lea.sflag [#allocation6], %s621
          %s623 = sand.u32 %s76, 1
          %s624 = smul.addr %s623, 4
          %s625 = scalar_lea.vmem [#allocation5], %s624
          %627 = vsyncadd %s622, 0
          %s628 = smul.addr %s40, 4
          %s629 = scalar_lea.hbm %s1, %s628
          %s631 = sshll.u32 %s629, 4
          %s632 = int_to_ptr.hbm [resolvable:$true] %s631
          %s633 = sshll.u32 %s625, 4
          %s634 = int_to_ptr.vmem [resolvable:$true] %s633
          %636 = dma.hbm_to_vmem [thread:$0]  %s632, 64, %s634, %s622
        $region80: #{tpu_custom_call.1} parent=71 // pred_fallthru
          _
        // Predicated region
        $region81: #{tpu_custom_call.1} parent=71 // pred_check
          %p637 = pneg %p112
        $region82: #{tpu_custom_call.1} parent=71 // pred_check_branch
          %639 = sbr.rel (%p637) target = $region84
        $region83: #{tpu_custom_call.1} parent=71 // pred_region
          %s640 = sand.u32 %s40, 1
          %s641 = scalar_lea.sflag [#allocation6], %s640
          %s642 = sand.u32 %s102, 1
          %s643 = scalar_lea.vmem [#allocation7], %s642
          %645 = vsyncadd %s641, 0
          %s646 = scalar_lea.hbm %s2, %s40
          %s648 = sshll.u32 %s646, 4
          %s649 = int_to_ptr.hbm [resolvable:$true] %s648
          %s650 = sshll.u32 %s643, 4
          %s651 = int_to_ptr.vmem [resolvable:$true] %s650
          %653 = dma.hbm_to_vmem [thread:$0]  %s649, 16, %s651, %s641
        $region84: #{tpu_custom_call.1} parent=71 // pred_fallthru
          _
        // Predicated region
        $region85: #{tpu_custom_call.1} parent=71 // pred_check
          %p654 = pneg %p138
        $region86: #{tpu_custom_call.1} parent=71 // pred_check_branch
          %656 = sbr.rel (%p654) target = $region88
        $region87: #{tpu_custom_call.1} parent=71 // pred_region
          %p657 = scmp.lt.s32.totalorder %s40, 1
          %s658 = scalar_select %p657, %s40, 1
          %s659 = scalar_lea.vmem %s3, %s658
        $region88: #{tpu_custom_call.1} parent=71 // pred_fallthru
          _
      $region72: #{tpu_custom_call.1} parent=5 // pred_fallthru
        _
      %p660 = scmp.le.s32.totalorder 1, %s40
      %p661 = scmp.lt.s32.totalorder %s40, 3
      %p662 = pnand %p660, %p661
      %p663 = pneg %p662
      // Predicated region
      $region89: #{tpu_custom_call.1} parent=5 // pred_check
        _
      $region90: #{tpu_custom_call.1} parent=5 // pred_check_branch
        %665 = sbr.rel (%p662) target = $region92
      $region91: #{tpu_custom_call.1} parent=5 // pred_region
        %s666 = ssub.s32 %s40, 1
        %s667 = sand.u32 %s53, 1
        %s668 = scalar_lea.sflag [#allocation3], %s667
        %s669 = sand.u32 %s53, 1
        %s670 = smul.addr %s669, 4
        %s671 = scalar_lea.vmem [#allocation2], %s670
        // Predicated region
        $region93: #{tpu_custom_call.1} parent=91 // pred_check
          %p672 = pneg %p66
        $region94: #{tpu_custom_call.1} parent=91 // pred_check_branch
          %674 = sbr.rel (%p672) target = $region96
        $region95: #{tpu_custom_call.1} parent=91 // pred_region
          %676 = dma.done %s668, 64
        $region96: #{tpu_custom_call.1} parent=91 // pred_fallthru
          _
        %s677 = sand.u32 %s45, 1
        %s678 = scalar_lea.sflag [#allocation6], %s677
        %s679 = sand.u32 %s79, 1
        %s680 = smul.addr %s679, 4
        %s681 = scalar_lea.vmem [#allocation5], %s680
        // Predicated region
        $region97: #{tpu_custom_call.1} parent=91 // pred_check
          %p682 = pneg %p92
        $region98: #{tpu_custom_call.1} parent=91 // pred_check_branch
          %684 = sbr.rel (%p682) target = $region100
        $region99: #{tpu_custom_call.1} parent=91 // pred_region
          %686 = dma.done %s678, 64
        $region100: #{tpu_custom_call.1} parent=91 // pred_fallthru
          _
        %s687 = sand.u32 %s45, 1
        %s688 = scalar_lea.sflag [#allocation6], %s687
        %s689 = sand.u32 %s105, 1
        %s690 = scalar_lea.vmem [#allocation7], %s689
        // Predicated region
        $region101: #{tpu_custom_call.1} parent=91 // pred_check
          %p691 = pneg %p118
        $region102: #{tpu_custom_call.1} parent=91 // pred_check_branch
          %693 = sbr.rel (%p691) target = $region104
        $region103: #{tpu_custom_call.1} parent=91 // pred_region
          %695 = dma.done %s688, 16
        $region104: #{tpu_custom_call.1} parent=91 // pred_fallthru
          _
        // Predicated region
        $region105: #{tpu_custom_call.1} parent=91 // pred_check
          %p696 = pneg %p291
        $region106: #{tpu_custom_call.1} parent=91 // pred_check_branch
          %698 = sbr.rel (%p696) target = $region108
        $region107: #{tpu_custom_call.1} parent=91 // pred_region
          %700 = dma.done [#allocation9], 256
        $region108: #{tpu_custom_call.1} parent=91 // pred_fallthru
          _
        // Predicated region
        $region109: #{tpu_custom_call.1} parent=91 // pred_check
          %p701 = pneg %p333
        $region110: #{tpu_custom_call.1} parent=91 // pred_check_branch
          %703 = sbr.rel (%p701) target = $region112
        $region111: #{tpu_custom_call.1} parent=91 // pred_region
          %705 = dma.done [#allocation9], 256
        $region112: #{tpu_custom_call.1} parent=91 // pred_fallthru
          _
        %s706 = sand.u32 %s53, 1
        %s707 = scalar_lea.sflag [#allocation3], %s706
        %s708 = sand.u32 %s53, 1
        %s709 = smul.addr %s708, 4
        %s710 = scalar_lea.vmem [#allocation2], %s709
        %p711 = pneg %p66
        %p712 = pneg %p63
        %s713 = sand.u32 %s45, 1
        %s714 = scalar_lea.sflag [#allocation6], %s713
        %s715 = sand.u32 %s79, 1
        %s716 = smul.addr %s715, 4
        %s717 = scalar_lea.vmem [#allocation5], %s716
        %p718 = pneg %p92
        %p719 = pneg %p89
        %s720 = sand.u32 %s45, 1
        %s721 = scalar_lea.sflag [#allocation6], %s720
        %s722 = sand.u32 %s105, 1
        %s723 = scalar_lea.vmem [#allocation7], %s722
        %p724 = pneg %p118
        %p725 = pneg %p115
        %p726 = scmp.lt.s32.totalorder %s45, 1
        %s727 = scalar_select %p726, %s45, 1
        %s728 = scalar_lea.vmem %s3, %s727
        %p729 = pneg %p144
        %p730 = pneg %p141
        %p731 = pneg %p165
        %p732 = pneg %p162
        %p733 = pneg %p186
        %p734 = pneg %p183
        %p735 = pneg %p207
        %p736 = pneg %p204
        %p737 = pneg %p228
        %p738 = pneg %p225
        %p739 = pneg %p249
        %p740 = pneg %p246
        %p741 = pneg %p270
        %p742 = pneg %p267
        %p743 = pneg %p291
        %p744 = pneg %p288
        %p745 = pneg %p312
        %p746 = pneg %p309
        %p747 = pneg %p333
        %p748 = pneg %p330
        %p749 = pneg %p354
        %p750 = pneg %p351
        %p751 = pneg %p375
        %p752 = pneg %p372
        %p753 = pneg %p396
        %p754 = pneg %p393
        %p755 = pneg %p417
        %p756 = pneg %p414
        %p757 = pneg %p438
        %p758 = pneg %p435
        %p759 = pneg %p464
        %p760 = pneg %p461
        %s761 = sand.u32 %s451, 1
        %s762 = scalar_lea.sflag [#allocation4], %s761
        %s763 = sand.u32 %s451, 1
        %s764 = smul.addr %s763, 8
        %s765 = scalar_lea.vmem [#allocation11], %s764
        %p766 = pneg %p490
        %p767 = pneg %p487
        %s768 = sand.u32 %s45, 1
        %s769 = scalar_lea.sflag [#allocation13], %s768
        %s770 = sand.u32 %s477, 1
        %s771 = smul.addr %s770, 8
        %s772 = scalar_lea.vmem [#allocation12], %s771
        %p773 = pneg %p516
        %p774 = pneg %p513
        %s775 = sand.u32 %s45, 1
        %s776 = scalar_lea.sflag [#allocation13], %s775
        %s777 = sand.u32 %s503, 1
        %s778 = smul.addr %s777, 8
        %s779 = scalar_lea.vmem [#allocation14], %s778
        %p780 = scmp.lt.s32.totalorder %s45, 1
        %s781 = scalar_select %p780, %s45, 1
        %s782 = scalar_lea.vmem %s3, %s781
        %v784 = vld [vmem:[%s671] sm:$0xf]
        %v785 = vld [vmem:[%s681] sm:$0xf]
        %v786 = vld [vmem:[%s690] sm:$0x1]
        %v787 = vld [vmem:[%s782] sm:$0x1]
        %v788 = vlaneseq
        %v789 = vshrl.u32 %v788, 7
        %v790 = vlaneseq
        %v791 = vand.u32 %v790, 127
        %vm792 = vcmp.le.s32.totalorder %v791, %v789
        %v793 = vsel %vm792, 0.0, -1e+30
        %v795 = vperm.slane %v786, 0
        %v797 = vadd.f32 %v793, %v795
        %v798 = vld [vmem:[%s4] sm:$0xf]
        %v799 = vld [vmem:[%s4 + $0x4] sm:$0xf]
        %v800 = vld [vmem:[%s4 + $0x8] sm:$0xf]
        %v801 = vld [vmem:[%s4 + $0xc] sm:$0xf]
        %v802 = vld [vmem:[%s7] sm:$0x1]
        %v804 = vperm.slane %v802, 0
        %v810 = vunpack.c.l.b16 %v798
        %v811 = vunpack.c.l.b16 %v799
        %v812 = vunpack.c.l.b16 %v800
        %v813 = vunpack.c.l.b16 %v801
        %v814 = vpack.c.b16 %v811, %v810
        %v815 = vpack.c.b16 %v813, %v812
        %vm818 = vcmask 261120
        %v820 = vsel %vm818, %v784, 0
        %822 = vmatpush.bf16.msra.mxu0 0
        %823 = vmatpush.bf16.msra.mxu0 0
        %824 = vmatpush.bf16.msra.mxu0 0
        %825 = vmatpush.bf16.msra.mxu0 0
        %826 = vmatpush.bf16.msra.mxu0 0
        %827 = vmatpush.bf16.msra.mxu0 0
        %828 = vmatpush.bf16.msra.mxu0 %v815
        %829 = vmatpush.bf16.msra.mxu0 %v814
        %830 = vmatmul.bf16.gmra.mxu0 %v820
        %v831 = vpop.f32.mrf.mxu0
        %v832 = vadd.f32 %v804, %v831
        %v833 = vpop.f32.mrf.mxu0
        %834 = vdwg.mxu0
        %v835 = vld [vmem:[%s5] sm:$0xf]
        %v836 = vld [vmem:[%s5 + $0x4] sm:$0xf]
        %v837 = vld [vmem:[%s5 + $0x8] sm:$0xf]
        %v838 = vld [vmem:[%s5 + $0xc] sm:$0xf]
        %v839 = vld [vmem:[%s8] sm:$0x1]
        %v841 = vperm.slane %v839, 0
        %v847 = vunpack.c.l.b16 %v835
        %v848 = vunpack.c.l.b16 %v836
        %v849 = vunpack.c.l.b16 %v837
        %v850 = vunpack.c.l.b16 %v838
        %v851 = vpack.c.b16 %v848, %v847
        %v852 = vpack.c.b16 %v850, %v849
        %855 = vmatpush.bf16.msra.mxu0 0
        %856 = vmatpush.bf16.msra.mxu0 0
        %857 = vmatpush.bf16.msra.mxu0 0
        %858 = vmatpush.bf16.msra.mxu0 0
        %859 = vmatpush.bf16.msra.mxu0 0
        %860 = vmatpush.bf16.msra.mxu0 0
        %861 = vmatpush.bf16.msra.mxu0 %v852
        %862 = vmatpush.bf16.msra.mxu0 %v851
        %863 = vmatmul.bf16.gmra.mxu0 %v820
        %v864 = vpop.f32.mrf.mxu0
        %v865 = vadd.f32 %v841, %v864
        %v866 = vpop.f32.mrf.mxu0
        %867 = vdwg.mxu0
        %v868 = vld [vmem:[%s6] sm:$0xf]
        %v869 = vld [vmem:[%s6 + $0x4] sm:$0xf]
        %v870 = vld [vmem:[%s6 + $0x8] sm:$0xf]
        %v871 = vld [vmem:[%s6 + $0xc] sm:$0xf]
        %v872 = vld [vmem:[%s9] sm:$0x1]
        %v874 = vperm.slane %v872, 0
        %v880 = vunpack.c.l.b16 %v868
        %v881 = vunpack.c.l.b16 %v869
        %v882 = vunpack.c.l.b16 %v870
        %v883 = vunpack.c.l.b16 %v871
        %v884 = vpack.c.b16 %v881, %v880
        %v885 = vpack.c.b16 %v883, %v882
        %888 = vmatpush.bf16.msra.mxu0 0
        %889 = vmatpush.bf16.msra.mxu0 0
        %890 = vmatpush.bf16.msra.mxu0 0
        %891 = vmatpush.bf16.msra.mxu0 0
        %892 = vmatpush.bf16.msra.mxu0 0
        %893 = vmatpush.bf16.msra.mxu0 0
        %894 = vmatpush.bf16.msra.mxu0 %v885
        %895 = vmatpush.bf16.msra.mxu0 %v884
        %896 = vmatmul.bf16.gmra.mxu0 %v820
        %v897 = vpop.f32.mrf.mxu0
        %v898 = vadd.f32 %v874, %v897
        %v899 = vpop.f32.mrf.mxu0
        %900 = vdwg.mxu0
        %v901 = vmul.f32 %v832, 0.35355338
        %903 = vrot.lane.b32.xlu0 %v901, 120
        %v904 = vpop.permute.xlu0 %903
        %906 = vrot.lane.b32.xlu0 %v901, 112
        %v907 = vpop.permute.xlu0 %906
        %909 = vrot.lane.b32.xlu0 %v901, 104
        %v910 = vpop.permute.xlu0 %909
        %v912 = vpack.c.bf16 %v901, %v901
        %v913 = vpack.c.bf16 %v904, %v904
        %v914 = vpack.c.bf16 %v907, %v907
        %v915 = vpack.c.bf16 %v910, %v910
        %917 = vrot.lane.b32.xlu0 %v865, 120
        %v918 = vpop.permute.xlu0 %917
        %920 = vrot.lane.b32.xlu0 %v865, 112
        %v921 = vpop.permute.xlu0 %920
        %923 = vrot.lane.b32.xlu0 %v865, 104
        %v924 = vpop.permute.xlu0 %923
        %v926 = vpack.c.bf16 %v865, %v865
        %v927 = vpack.c.bf16 %v918, %v918
        %v928 = vpack.c.bf16 %v921, %v921
        %v929 = vpack.c.bf16 %v924, %v924
        %931 = vrot.lane.b32.xlu0 %v898, 120
        %v932 = vpop.permute.xlu0 %931
        %934 = vrot.lane.b32.xlu0 %v898, 112
        %v935 = vpop.permute.xlu0 %934
        %937 = vrot.lane.b32.xlu0 %v898, 104
        %v938 = vpop.permute.xlu0 %937
        %v940 = vpack.c.bf16 %v898, %v898
        %v941 = vpack.c.bf16 %v932, %v932
        %v942 = vpack.c.bf16 %v935, %v935
        %v943 = vpack.c.bf16 %v938, %v938
        %vm944 = vcmask 64512
        %v946 = vsel %vm944, %v912, 0
        %v949 = vsel %vm944, %v926, 0
        %951 = vmatpush.bf16.xpose.msra.mxu0 0
        %952 = vmatpush.bf16.xpose.msra.mxu0 0
        %953 = vmatpush.bf16.xpose.msra.mxu0 0
        %954 = vmatpush.bf16.xpose.msra.mxu0 0
        %955 = vmatpush.bf16.xpose.msra.mxu0 0
        %956 = vmatpush.bf16.xpose.msra.mxu0 0
        %957 = vmatpush.bf16.xpose.msra.mxu0 0
        %958 = vmatpush.bf16.xpose.msra.mxu0 %v949
        %959 = vmatmul.bf16.gmra.mxu0 %v946
        %v960 = vpop.f32.mrf.mxu0
        %v961 = vadd.f32 %v797, %v960
        %v962 = vpop.f32.mrf.mxu0
        %963 = vdwg.mxu0
        %v965 = vsel %vm944, %v913, 0
        %v968 = vsel %vm944, %v927, 0
        %970 = vmatpush.bf16.xpose.msra.mxu0 0
        %971 = vmatpush.bf16.xpose.msra.mxu0 0
        %972 = vmatpush.bf16.xpose.msra.mxu0 0
        %973 = vmatpush.bf16.xpose.msra.mxu0 0
        %974 = vmatpush.bf16.xpose.msra.mxu0 0
        %975 = vmatpush.bf16.xpose.msra.mxu0 0
        %976 = vmatpush.bf16.xpose.msra.mxu0 0
        %977 = vmatpush.bf16.xpose.msra.mxu0 %v968
        %978 = vmatmul.bf16.gmra.mxu0 %v965
        %v979 = vpop.f32.mrf.mxu0
        %v980 = vadd.f32 %v797, %v979
        %v981 = vpop.f32.mrf.mxu0
        %982 = vdwg.mxu0
        %v984 = vsel %vm944, %v914, 0
        %v987 = vsel %vm944, %v928, 0
        %989 = vmatpush.bf16.xpose.msra.mxu0 0
        %990 = vmatpush.bf16.xpose.msra.mxu0 0
        %991 = vmatpush.bf16.xpose.msra.mxu0 0
        %992 = vmatpush.bf16.xpose.msra.mxu0 0
        %993 = vmatpush.bf16.xpose.msra.mxu0 0
        %994 = vmatpush.bf16.xpose.msra.mxu0 0
        %995 = vmatpush.bf16.xpose.msra.mxu0 0
        %996 = vmatpush.bf16.xpose.msra.mxu0 %v987
        %997 = vmatmul.bf16.gmra.mxu0 %v984
        %v998 = vpop.f32.mrf.mxu0
        %v999 = vadd.f32 %v797, %v998
        %v1000 = vpop.f32.mrf.mxu0
        %1001 = vdwg.mxu0
        %v1003 = vsel %vm944, %v915, 0
        %v1006 = vsel %vm944, %v929, 0
        %1008 = vmatpush.bf16.xpose.msra.mxu0 0
        %1009 = vmatpush.bf16.xpose.msra.mxu0 0
        %1010 = vmatpush.bf16.xpose.msra.mxu0 0
        %1011 = vmatpush.bf16.xpose.msra.mxu0 0
        %1012 = vmatpush.bf16.xpose.msra.mxu0 0
        %1013 = vmatpush.bf16.xpose.msra.mxu0 0
        %1014 = vmatpush.bf16.xpose.msra.mxu0 0
        %1015 = vmatpush.bf16.xpose.msra.mxu0 %v1006
        %1016 = vmatmul.bf16.gmra.mxu0 %v1003
        %v1017 = vpop.f32.mrf.mxu0
        %v1018 = vadd.f32 %v797, %v1017
        %v1019 = vpop.f32.mrf.mxu0
        %1020 = vdwg.mxu0
        %v1021 = vsel %vm944, %v961, -inf
        %1022 = vmax.xlane.f32.xlu0 %v1021
        %v1023 = vpop.xlane.xlu0 %1022
        %v1024 = vsel %vm944, %v980, -inf
        %1025 = vmax.xlane.f32.xlu0 %v1024
        %v1026 = vpop.xlane.xlu0 %1025
        %v1027 = vsel %vm944, %v999, -inf
        %1028 = vmax.xlane.f32.xlu0 %v1027
        %v1029 = vpop.xlane.xlu0 %1028
        %v1030 = vsel %vm944, %v1018, -inf
        %1031 = vmax.xlane.f32.xlu0 %v1030
        %v1032 = vpop.xlane.xlu0 %1031
        %v1033 = vsub.f32 %v961, %v1023
        %v1034 = vsub.f32 %v980, %v1026
        %v1035 = vsub.f32 %v999, %v1029
        %v1036 = vsub.f32 %v1018, %v1032
        %v1037 = vmul.f32 %v1033, 1.442695
        %v1038 = vpow.pop %v1037
        %v1039 = vmul.f32 %v1034, 1.442695
        %v1040 = vpow.pop %v1039
        %v1041 = vmul.f32 %v1035, 1.442695
        %v1042 = vpow.pop %v1041
        %v1043 = vmul.f32 %v1036, 1.442695
        %v1044 = vpow.pop %v1043
        %v1045 = vsel %vm944, %v1038, 0.0
        %1046 = vadd.xlane.f32.xlu0 %v1045
        %v1047 = vpop.xlane.xlu0 %1046
        %v1048 = vsel %vm944, %v1040, 0.0
        %1049 = vadd.xlane.f32.xlu0 %v1048
        %v1050 = vpop.xlane.xlu0 %1049
        %v1051 = vsel %vm944, %v1042, 0.0
        %1052 = vadd.xlane.f32.xlu0 %v1051
        %v1053 = vpop.xlane.xlu0 %1052
        %v1054 = vsel %vm944, %v1044, 0.0
        %1055 = vadd.xlane.f32.xlu0 %v1054
        %v1056 = vpop.xlane.xlu0 %1055
        %v1057 = vrcp.pop %v1047
        %v1058 = vrcp.pop %v1050
        %v1059 = vrcp.pop %v1053
        %v1060 = vrcp.pop %v1056
        %v1061 = vmul.f32 %v1038, %v1057
        %v1062 = vmul.f32 %v1040, %v1058
        %v1063 = vmul.f32 %v1042, %v1059
        %v1064 = vmul.f32 %v1044, %v1060
        %v1065 = vsel %vm944, %v1061, 0.0
        %v1066 = vsel %vm944, %v1062, 0.0
        %v1067 = vadd.f32 %v1065, %v1066
        %v1068 = vsel %vm944, %v1063, 0.0
        %v1069 = vadd.f32 %v1067, %v1068
        %v1070 = vsel %vm944, %v1064, 0.0
        %v1071 = vadd.f32 %v1069, %v1070
        %v1072 = vmul.f32 %v1071, 0.25
        %v1073 = vpack.c.bf16 %v1061, %v1061
        %v1074 = vpack.c.bf16 %v1062, %v1062
        %v1075 = vpack.c.bf16 %v1063, %v1063
        %v1076 = vpack.c.bf16 %v1064, %v1064
        %v1078 = vsel %vm944, %v1073, 0
        %vm1080 = vcmask 1043456
        %v1082 = vsel %vm1080, %v940, 0
        %1084 = vmatpush.bf16.msra.mxu0 0
        %1085 = vmatpush.bf16.msra.mxu0 0
        %1086 = vmatpush.bf16.msra.mxu0 0
        %1087 = vmatpush.bf16.msra.mxu0 0
        %1088 = vmatpush.bf16.msra.mxu0 0
        %1089 = vmatpush.bf16.msra.mxu0 0
        %1090 = vmatpush.bf16.msra.mxu0 0
        %1091 = vmatpush.bf16.msra.mxu0 %v1082
        %1092 = vmatmul.bf16.gmra.mxu0 %v1078
        %v1093 = vpop.f32.mrf.mxu0
        %v1094 = vadd.f32 0.0, %v1093
        %v1095 = vpop.f32.mrf.mxu0
        %1096 = vdwg.mxu0
        %v1098 = vsel %vm944, %v1074, 0
        %v1101 = vsel %vm1080, %v941, 0
        %1103 = vmatpush.bf16.msra.mxu0 0
        %1104 = vmatpush.bf16.msra.mxu0 0
        %1105 = vmatpush.bf16.msra.mxu0 0
        %1106 = vmatpush.bf16.msra.mxu0 0
        %1107 = vmatpush.bf16.msra.mxu0 0
        %1108 = vmatpush.bf16.msra.mxu0 0
        %1109 = vmatpush.bf16.msra.mxu0 0
        %1110 = vmatpush.bf16.msra.mxu0 %v1101
        %1111 = vmatmul.bf16.gmra.mxu0 %v1098
        %v1112 = vpop.f32.mrf.mxu0
        %v1113 = vadd.f32 0.0, %v1112
        %v1114 = vpop.f32.mrf.mxu0
        %1115 = vdwg.mxu0
        %v1117 = vsel %vm944, %v1075, 0
        %v1120 = vsel %vm1080, %v942, 0
        %1122 = vmatpush.bf16.msra.mxu0 0
        %1123 = vmatpush.bf16.msra.mxu0 0
        %1124 = vmatpush.bf16.msra.mxu0 0
        %1125 = vmatpush.bf16.msra.mxu0 0
        %1126 = vmatpush.bf16.msra.mxu0 0
        %1127 = vmatpush.bf16.msra.mxu0 0
        %1128 = vmatpush.bf16.msra.mxu0 0
        %1129 = vmatpush.bf16.msra.mxu0 %v1120
        %1130 = vmatmul.bf16.gmra.mxu0 %v1117
        %v1131 = vpop.f32.mrf.mxu0
        %v1132 = vadd.f32 0.0, %v1131
        %v1133 = vpop.f32.mrf.mxu0
        %1134 = vdwg.mxu0
        %v1136 = vsel %vm944, %v1076, 0
        %v1139 = vsel %vm1080, %v943, 0
        %1141 = vmatpush.bf16.msra.mxu0 0
        %1142 = vmatpush.bf16.msra.mxu0 0
        %1143 = vmatpush.bf16.msra.mxu0 0
        %1144 = vmatpush.bf16.msra.mxu0 0
        %1145 = vmatpush.bf16.msra.mxu0 0
        %1146 = vmatpush.bf16.msra.mxu0 0
        %1147 = vmatpush.bf16.msra.mxu0 0
        %1148 = vmatpush.bf16.msra.mxu0 %v1139
        %1149 = vmatmul.bf16.gmra.mxu0 %v1136
        %v1150 = vpop.f32.mrf.mxu0
        %v1151 = vadd.f32 0.0, %v1150
        %v1152 = vpop.f32.mrf.mxu0
        %1153 = vdwg.mxu0
        %v1154 = vpack.c.bf16 %v1094, %v1094
        %v1155 = vpack.c.bf16 %v1113, %v1113
        %v1156 = vpack.c.bf16 %v1132, %v1132
        %v1157 = vpack.c.bf16 %v1151, %v1151
        %v1158 = vld [vmem:[#allocation8] sm:$0xf]
        %v1159 = vld [vmem:[#allocation8 + $0x4] sm:$0xf]
        %v1160 = vld [vmem:[#allocation8 + $0x8] sm:$0xf]
        %v1161 = vld [vmem:[#allocation8 + $0xc] sm:$0xf]
        %v1163 = vsel %vm944, %v1154, 0
        %v1166 = vsel %vm1080, %v1158, 0
        %1168 = vmatpush.bf16.msra.mxu0 0
        %1169 = vmatpush.bf16.msra.mxu0 0
        %1170 = vmatpush.bf16.msra.mxu0 0
        %1171 = vmatpush.bf16.msra.mxu0 0
        %1172 = vmatpush.bf16.msra.mxu0 0
        %1173 = vmatpush.bf16.msra.mxu0 0
        %1174 = vmatpush.bf16.msra.mxu0 0
        %1175 = vmatpush.bf16.msra.mxu0 %v1166
        %1176 = vmatmul.bf16.gmra.mxu0 %v1163
        %v1177 = vpop.f32.mrf.mxu0
        %v1178 = vadd.f32 0.0, %v1177
        %v1179 = vpop.f32.mrf.mxu0
        %1180 = vdwg.mxu0
        %v1182 = vsel %vm944, %v1155, 0
        %v1185 = vsel %vm1080, %v1159, 0
        %1187 = vmatpush.bf16.msra.mxu0 0
        %1188 = vmatpush.bf16.msra.mxu0 0
        %1189 = vmatpush.bf16.msra.mxu0 0
        %1190 = vmatpush.bf16.msra.mxu0 0
        %1191 = vmatpush.bf16.msra.mxu0 0
        %1192 = vmatpush.bf16.msra.mxu0 0
        %1193 = vmatpush.bf16.msra.mxu0 0
        %1194 = vmatpush.bf16.msra.mxu0 %v1185
        %1195 = vmatmul.bf16.gmra.mxu0 %v1182
        %v1196 = vpop.f32.mrf.mxu0
        %v1197 = vadd.f32 0.0, %v1196
        %v1198 = vpop.f32.mrf.mxu0
        %1199 = vdwg.mxu0
        %v1201 = vsel %vm944, %v1156, 0
        %v1204 = vsel %vm1080, %v1160, 0
        %1206 = vmatpush.bf16.msra.mxu0 0
        %1207 = vmatpush.bf16.msra.mxu0 0
        %1208 = vmatpush.bf16.msra.mxu0 0
        %1209 = vmatpush.bf16.msra.mxu0 0
        %1210 = vmatpush.bf16.msra.mxu0 0
        %1211 = vmatpush.bf16.msra.mxu0 0
        %1212 = vmatpush.bf16.msra.mxu0 0
        %1213 = vmatpush.bf16.msra.mxu0 %v1204
        %1214 = vmatmul.bf16.gmra.mxu0 %v1201
        %v1215 = vpop.f32.mrf.mxu0
        %v1216 = vadd.f32 0.0, %v1215
        %v1217 = vpop.f32.mrf.mxu0
        %1218 = vdwg.mxu0
        %v1220 = vsel %vm944, %v1157, 0
        %v1223 = vsel %vm1080, %v1161, 0
        %1225 = vmatpush.bf16.msra.mxu0 0
        %1226 = vmatpush.bf16.msra.mxu0 0
        %1227 = vmatpush.bf16.msra.mxu0 0
        %1228 = vmatpush.bf16.msra.mxu0 0
        %1229 = vmatpush.bf16.msra.mxu0 0
        %1230 = vmatpush.bf16.msra.mxu0 0
        %1231 = vmatpush.bf16.msra.mxu0 0
        %1232 = vmatpush.bf16.msra.mxu0 %v1223
        %1233 = vmatmul.bf16.gmra.mxu0 %v1220
        %v1234 = vpop.f32.mrf.mxu0
        %v1235 = vadd.f32 0.0, %v1234
        %v1236 = vpop.f32.mrf.mxu0
        %1237 = vdwg.mxu0
        %v1238 = vsel %vm818, %v1178, 0.0
        %v1239 = vsel %vm818, %v1197, 0.0
        %v1240 = vadd.f32 %v1238, %v1239
        %v1241 = vsel %vm818, %v1216, 0.0
        %v1242 = vadd.f32 %v1240, %v1241
        %v1243 = vsel %vm818, %v1235, 0.0
        %v1244 = vadd.f32 %v1242, %v1243
        %v1245 = vld [vmem:[%s11] sm:$0x1]
        %v1247 = vperm.slane %v1245, 0
        %v1249 = vadd.f32 %v1244, %v1247
        %v1250 = vpack.c.bf16 %v1249, %v1249
        %v1251 = vld [vmem:[%s4] sm:$0xf]
        %v1252 = vld [vmem:[%s4 + $0x4] sm:$0xf]
        %v1253 = vld [vmem:[%s4 + $0x8] sm:$0xf]
        %v1254 = vld [vmem:[%s4 + $0xc] sm:$0xf]
        %v1255 = vld [vmem:[%s7] sm:$0x1]
        %v1257 = vperm.slane %v1255, 0
        %v1263 = vunpack.c.l.b16 %v1251
        %v1264 = vunpack.c.l.b16 %v1252
        %v1265 = vunpack.c.l.b16 %v1253
        %v1266 = vunpack.c.l.b16 %v1254
        %v1267 = vpack.c.b16 %v1264, %v1263
        %v1268 = vpack.c.b16 %v1266, %v1265
        %v1272 = vsel %vm818, %v1250, 0
        %1274 = vmatpush.bf16.msra.mxu0 0
        %1275 = vmatpush.bf16.msra.mxu0 0
        %1276 = vmatpush.bf16.msra.mxu0 0
        %1277 = vmatpush.bf16.msra.mxu0 0
        %1278 = vmatpush.bf16.msra.mxu0 0
        %1279 = vmatpush.bf16.msra.mxu0 0
        %1280 = vmatpush.bf16.msra.mxu0 %v1268
        %1281 = vmatpush.bf16.msra.mxu0 %v1267
        %1282 = vmatmul.bf16.gmra.mxu0 %v1272
        %v1283 = vpop.f32.mrf.mxu0
        %v1284 = vadd.f32 %v1257, %v1283
        %v1285 = vpop.f32.mrf.mxu0
        %1286 = vdwg.mxu0
        %v1287 = vld [vmem:[%s5] sm:$0xf]
        %v1288 = vld [vmem:[%s5 + $0x4] sm:$0xf]
        %v1289 = vld [vmem:[%s5 + $0x8] sm:$0xf]
        %v1290 = vld [vmem:[%s5 + $0xc] sm:$0xf]
        %v1291 = vld [vmem:[%s8] sm:$0x1]
        %v1293 = vperm.slane %v1291, 0
        %v1299 = vunpack.c.l.b16 %v1287
        %v1300 = vunpack.c.l.b16 %v1288
        %v1301 = vunpack.c.l.b16 %v1289
        %v1302 = vunpack.c.l.b16 %v1290
        %v1303 = vpack.c.b16 %v1300, %v1299
        %v1304 = vpack.c.b16 %v1302, %v1301
        %v1308 = vsel %vm818, %v785, 0
        %1310 = vmatpush.bf16.msra.mxu0 0
        %1311 = vmatpush.bf16.msra.mxu0 0
        %1312 = vmatpush.bf16.msra.mxu0 0
        %1313 = vmatpush.bf16.msra.mxu0 0
        %1314 = vmatpush.bf16.msra.mxu0 0
        %1315 = vmatpush.bf16.msra.mxu0 0
        %1316 = vmatpush.bf16.msra.mxu0 %v1304
        %1317 = vmatpush.bf16.msra.mxu0 %v1303
        %1318 = vmatmul.bf16.gmra.mxu0 %v1308
        %v1319 = vpop.f32.mrf.mxu0
        %v1320 = vadd.f32 %v1293, %v1319
        %v1321 = vpop.f32.mrf.mxu0
        %1322 = vdwg.mxu0
        %v1323 = vld [vmem:[%s6] sm:$0xf]
        %v1324 = vld [vmem:[%s6 + $0x4] sm:$0xf]
        %v1325 = vld [vmem:[%s6 + $0x8] sm:$0xf]
        %v1326 = vld [vmem:[%s6 + $0xc] sm:$0xf]
        %v1327 = vld [vmem:[%s9] sm:$0x1]
        %v1329 = vperm.slane %v1327, 0
        %v1335 = vunpack.c.l.b16 %v1323
        %v1336 = vunpack.c.l.b16 %v1324
        %v1337 = vunpack.c.l.b16 %v1325
        %v1338 = vunpack.c.l.b16 %v1326
        %v1339 = vpack.c.b16 %v1336, %v1335
        %v1340 = vpack.c.b16 %v1338, %v1337
        %1343 = vmatpush.bf16.msra.mxu0 0
        %1344 = vmatpush.bf16.msra.mxu0 0
        %1345 = vmatpush.bf16.msra.mxu0 0
        %1346 = vmatpush.bf16.msra.mxu0 0
        %1347 = vmatpush.bf16.msra.mxu0 0
        %1348 = vmatpush.bf16.msra.mxu0 0
        %1349 = vmatpush.bf16.msra.mxu0 %v1340
        %1350 = vmatpush.bf16.msra.mxu0 %v1339
        %1351 = vmatmul.bf16.gmra.mxu0 %v1308
        %v1352 = vpop.f32.mrf.mxu0
        %v1353 = vadd.f32 %v1329, %v1352
        %v1354 = vpop.f32.mrf.mxu0
        %1355 = vdwg.mxu0
        %v1356 = vmul.f32 %v1284, 0.35355338
        %1358 = vrot.lane.b32.xlu0 %v1356, 120
        %v1359 = vpop.permute.xlu0 %1358
        %1361 = vrot.lane.b32.xlu0 %v1356, 112
        %v1362 = vpop.permute.xlu0 %1361
        %1364 = vrot.lane.b32.xlu0 %v1356, 104
        %v1365 = vpop.permute.xlu0 %1364
        %v1367 = vpack.c.bf16 %v1356, %v1356
        %v1368 = vpack.c.bf16 %v1359, %v1359
        %v1369 = vpack.c.bf16 %v1362, %v1362
        %v1370 = vpack.c.bf16 %v1365, %v1365
        %1372 = vrot.lane.b32.xlu0 %v1320, 120
        %v1373 = vpop.permute.xlu0 %1372
        %1375 = vrot.lane.b32.xlu0 %v1320, 112
        %v1376 = vpop.permute.xlu0 %1375
        %1378 = vrot.lane.b32.xlu0 %v1320, 104
        %v1379 = vpop.permute.xlu0 %1378
        %v1381 = vpack.c.bf16 %v1320, %v1320
        %v1382 = vpack.c.bf16 %v1373, %v1373
        %v1383 = vpack.c.bf16 %v1376, %v1376
        %v1384 = vpack.c.bf16 %v1379, %v1379
        %1386 = vrot.lane.b32.xlu0 %v1353, 120
        %v1387 = vpop.permute.xlu0 %1386
        %1389 = vrot.lane.b32.xlu0 %v1353, 112
        %v1390 = vpop.permute.xlu0 %1389
        %1392 = vrot.lane.b32.xlu0 %v1353, 104
        %v1393 = vpop.permute.xlu0 %1392
        %v1395 = vpack.c.bf16 %v1353, %v1353
        %v1396 = vpack.c.bf16 %v1387, %v1387
        %v1397 = vpack.c.bf16 %v1390, %v1390
        %v1398 = vpack.c.bf16 %v1393, %v1393
        %v1400 = vperm.slane %v787, 0
        %v1403 = vsel %vm944, %v1367, 0
        %v1406 = vsel %vm944, %v1381, 0
        %1408 = vmatpush.bf16.xpose.msra.mxu0 0
        %1409 = vmatpush.bf16.xpose.msra.mxu0 0
        %1410 = vmatpush.bf16.xpose.msra.mxu0 0
        %1411 = vmatpush.bf16.xpose.msra.mxu0 0
        %1412 = vmatpush.bf16.xpose.msra.mxu0 0
        %1413 = vmatpush.bf16.xpose.msra.mxu0 0
        %1414 = vmatpush.bf16.xpose.msra.mxu0 0
        %1415 = vmatpush.bf16.xpose.msra.mxu0 %v1406
        %1416 = vmatmul.bf16.gmra.mxu0 %v1403
        %v1417 = vpop.f32.mrf.mxu0
        %v1418 = vadd.f32 %v1400, %v1417
        %v1419 = vpop.f32.mrf.mxu0
        %1420 = vdwg.mxu0
        %v1422 = vsel %vm944, %v1368, 0
        %v1425 = vsel %vm944, %v1382, 0
        %1427 = vmatpush.bf16.xpose.msra.mxu0 0
        %1428 = vmatpush.bf16.xpose.msra.mxu0 0
        %1429 = vmatpush.bf16.xpose.msra.mxu0 0
        %1430 = vmatpush.bf16.xpose.msra.mxu0 0
        %1431 = vmatpush.bf16.xpose.msra.mxu0 0
        %1432 = vmatpush.bf16.xpose.msra.mxu0 0
        %1433 = vmatpush.bf16.xpose.msra.mxu0 0
        %1434 = vmatpush.bf16.xpose.msra.mxu0 %v1425
        %1435 = vmatmul.bf16.gmra.mxu0 %v1422
        %v1436 = vpop.f32.mrf.mxu0
        %v1437 = vadd.f32 %v1400, %v1436
        %v1438 = vpop.f32.mrf.mxu0
        %1439 = vdwg.mxu0
        %v1441 = vsel %vm944, %v1369, 0
        %v1444 = vsel %vm944, %v1383, 0
        %1446 = vmatpush.bf16.xpose.msra.mxu0 0
        %1447 = vmatpush.bf16.xpose.msra.mxu0 0
        %1448 = vmatpush.bf16.xpose.msra.mxu0 0
        %1449 = vmatpush.bf16.xpose.msra.mxu0 0
        %1450 = vmatpush.bf16.xpose.msra.mxu0 0
        %1451 = vmatpush.bf16.xpose.msra.mxu0 0
        %1452 = vmatpush.bf16.xpose.msra.mxu0 0
        %1453 = vmatpush.bf16.xpose.msra.mxu0 %v1444
        %1454 = vmatmul.bf16.gmra.mxu0 %v1441
        %v1455 = vpop.f32.mrf.mxu0
        %v1456 = vadd.f32 %v1400, %v1455
        %v1457 = vpop.f32.mrf.mxu0
        %1458 = vdwg.mxu0
        %v1460 = vsel %vm944, %v1370, 0
        %v1463 = vsel %vm944, %v1384, 0
        %1465 = vmatpush.bf16.xpose.msra.mxu0 0
        %1466 = vmatpush.bf16.xpose.msra.mxu0 0
        %1467 = vmatpush.bf16.xpose.msra.mxu0 0
        %1468 = vmatpush.bf16.xpose.msra.mxu0 0
        %1469 = vmatpush.bf16.xpose.msra.mxu0 0
        %1470 = vmatpush.bf16.xpose.msra.mxu0 0
        %1471 = vmatpush.bf16.xpose.msra.mxu0 0
        %1472 = vmatpush.bf16.xpose.msra.mxu0 %v1463
        %1473 = vmatmul.bf16.gmra.mxu0 %v1460
        %v1474 = vpop.f32.mrf.mxu0
        %v1475 = vadd.f32 %v1400, %v1474
        %v1476 = vpop.f32.mrf.mxu0
        %1477 = vdwg.mxu0
        %v1478 = vsel %vm944, %v1418, -inf
        %1479 = vmax.xlane.f32.xlu0 %v1478
        %v1480 = vpop.xlane.xlu0 %1479
        %v1481 = vsel %vm944, %v1437, -inf
        %1482 = vmax.xlane.f32.xlu0 %v1481
        %v1483 = vpop.xlane.xlu0 %1482
        %v1484 = vsel %vm944, %v1456, -inf
        %1485 = vmax.xlane.f32.xlu0 %v1484
        %v1486 = vpop.xlane.xlu0 %1485
        %v1487 = vsel %vm944, %v1475, -inf
        %1488 = vmax.xlane.f32.xlu0 %v1487
        %v1489 = vpop.xlane.xlu0 %1488
        %v1490 = vsub.f32 %v1418, %v1480
        %v1491 = vsub.f32 %v1437, %v1483
        %v1492 = vsub.f32 %v1456, %v1486
        %v1493 = vsub.f32 %v1475, %v1489
        %v1494 = vmul.f32 %v1490, 1.442695
        %v1495 = vpow.pop %v1494
        %v1496 = vmul.f32 %v1491, 1.442695
        %v1497 = vpow.pop %v1496
        %v1498 = vmul.f32 %v1492, 1.442695
        %v1499 = vpow.pop %v1498
        %v1500 = vmul.f32 %v1493, 1.442695
        %v1501 = vpow.pop %v1500
        %v1502 = vsel %vm944, %v1495, 0.0
        %1503 = vadd.xlane.f32.xlu0 %v1502
        %v1504 = vpop.xlane.xlu0 %1503
        %v1505 = vsel %vm944, %v1497, 0.0
        %1506 = vadd.xlane.f32.xlu0 %v1505
        %v1507 = vpop.xlane.xlu0 %1506
        %v1508 = vsel %vm944, %v1499, 0.0
        %1509 = vadd.xlane.f32.xlu0 %v1508
        %v1510 = vpop.xlane.xlu0 %1509
        %v1511 = vsel %vm944, %v1501, 0.0
        %1512 = vadd.xlane.f32.xlu0 %v1511
        %v1513 = vpop.xlane.xlu0 %1512
        %v1514 = vrcp.pop %v1504
        %v1515 = vrcp.pop %v1507
        %v1516 = vrcp.pop %v1510
        %v1517 = vrcp.pop %v1513
        %v1518 = vmul.f32 %v1495, %v1514
        %v1519 = vmul.f32 %v1497, %v1515
        %v1520 = vmul.f32 %v1499, %v1516
        %v1521 = vmul.f32 %v1501, %v1517
        %v1522 = vsel %vm944, %v1518, 0.0
        %v1523 = vsel %vm944, %v1519, 0.0
        %v1524 = vadd.f32 %v1522, %v1523
        %v1525 = vsel %vm944, %v1520, 0.0
        %v1526 = vadd.f32 %v1524, %v1525
        %v1527 = vsel %vm944, %v1521, 0.0
        %v1528 = vadd.f32 %v1526, %v1527
        %v1529 = vmul.f32 %v1528, 0.25
        %v1530 = vpack.c.bf16 %v1518, %v1518
        %v1531 = vpack.c.bf16 %v1519, %v1519
        %v1532 = vpack.c.bf16 %v1520, %v1520
        %v1533 = vpack.c.bf16 %v1521, %v1521
        %v1535 = vsel %vm944, %v1530, 0
        %v1538 = vsel %vm1080, %v1395, 0
        %1540 = vmatpush.bf16.msra.mxu0 0
        %1541 = vmatpush.bf16.msra.mxu0 0
        %1542 = vmatpush.bf16.msra.mxu0 0
        %1543 = vmatpush.bf16.msra.mxu0 0
        %1544 = vmatpush.bf16.msra.mxu0 0
        %1545 = vmatpush.bf16.msra.mxu0 0
        %1546 = vmatpush.bf16.msra.mxu0 0
        %1547 = vmatpush.bf16.msra.mxu0 %v1538
        %1548 = vmatmul.bf16.gmra.mxu0 %v1535
        %v1549 = vpop.f32.mrf.mxu0
        %v1550 = vadd.f32 0.0, %v1549
        %v1551 = vpop.f32.mrf.mxu0
        %1552 = vdwg.mxu0
        %v1554 = vsel %vm944, %v1531, 0
        %v1557 = vsel %vm1080, %v1396, 0
        %1559 = vmatpush.bf16.msra.mxu0 0
        %1560 = vmatpush.bf16.msra.mxu0 0
        %1561 = vmatpush.bf16.msra.mxu0 0
        %1562 = vmatpush.bf16.msra.mxu0 0
        %1563 = vmatpush.bf16.msra.mxu0 0
        %1564 = vmatpush.bf16.msra.mxu0 0
        %1565 = vmatpush.bf16.msra.mxu0 0
        %1566 = vmatpush.bf16.msra.mxu0 %v1557
        %1567 = vmatmul.bf16.gmra.mxu0 %v1554
        %v1568 = vpop.f32.mrf.mxu0
        %v1569 = vadd.f32 0.0, %v1568
        %v1570 = vpop.f32.mrf.mxu0
        %1571 = vdwg.mxu0
        %v1573 = vsel %vm944, %v1532, 0
        %v1576 = vsel %vm1080, %v1397, 0
        %1578 = vmatpush.bf16.msra.mxu0 0
        %1579 = vmatpush.bf16.msra.mxu0 0
        %1580 = vmatpush.bf16.msra.mxu0 0
        %1581 = vmatpush.bf16.msra.mxu0 0
        %1582 = vmatpush.bf16.msra.mxu0 0
        %1583 = vmatpush.bf16.msra.mxu0 0
        %1584 = vmatpush.bf16.msra.mxu0 0
        %1585 = vmatpush.bf16.msra.mxu0 %v1576
        %1586 = vmatmul.bf16.gmra.mxu0 %v1573
        %v1587 = vpop.f32.mrf.mxu0
        %v1588 = vadd.f32 0.0, %v1587
        %v1589 = vpop.f32.mrf.mxu0
        %1590 = vdwg.mxu0
        %v1592 = vsel %vm944, %v1533, 0
        %v1595 = vsel %vm1080, %v1398, 0
        %1597 = vmatpush.bf16.msra.mxu0 0
        %1598 = vmatpush.bf16.msra.mxu0 0
        %1599 = vmatpush.bf16.msra.mxu0 0
        %1600 = vmatpush.bf16.msra.mxu0 0
        %1601 = vmatpush.bf16.msra.mxu0 0
        %1602 = vmatpush.bf16.msra.mxu0 0
        %1603 = vmatpush.bf16.msra.mxu0 0
        %1604 = vmatpush.bf16.msra.mxu0 %v1595
        %1605 = vmatmul.bf16.gmra.mxu0 %v1592
        %v1606 = vpop.f32.mrf.mxu0
        %v1607 = vadd.f32 0.0, %v1606
        %v1608 = vpop.f32.mrf.mxu0
        %1609 = vdwg.mxu0
        %v1610 = vpack.c.bf16 %v1550, %v1550
        %v1611 = vpack.c.bf16 %v1569, %v1569
        %v1612 = vpack.c.bf16 %v1588, %v1588
        %v1613 = vpack.c.bf16 %v1607, %v1607
        %v1614 = vld [vmem:[#allocation8] sm:$0xf]
        %v1615 = vld [vmem:[#allocation8 + $0x4] sm:$0xf]
        %v1616 = vld [vmem:[#allocation8 + $0x8] sm:$0xf]
        %v1617 = vld [vmem:[#allocation8 + $0xc] sm:$0xf]
        %v1619 = vsel %vm944, %v1610, 0
        %v1622 = vsel %vm1080, %v1614, 0
        %1624 = vmatpush.bf16.msra.mxu0 0
        %1625 = vmatpush.bf16.msra.mxu0 0
        %1626 = vmatpush.bf16.msra.mxu0 0
        %1627 = vmatpush.bf16.msra.mxu0 0
        %1628 = vmatpush.bf16.msra.mxu0 0
        %1629 = vmatpush.bf16.msra.mxu0 0
        %1630 = vmatpush.bf16.msra.mxu0 0
        %1631 = vmatpush.bf16.msra.mxu0 %v1622
        %1632 = vmatmul.bf16.gmra.mxu0 %v1619
        %v1633 = vpop.f32.mrf.mxu0
        %v1634 = vadd.f32 0.0, %v1633
        %v1635 = vpop.f32.mrf.mxu0
        %1636 = vdwg.mxu0
        %v1638 = vsel %vm944, %v1611, 0
        %v1641 = vsel %vm1080, %v1615, 0
        %1643 = vmatpush.bf16.msra.mxu0 0
        %1644 = vmatpush.bf16.msra.mxu0 0
        %1645 = vmatpush.bf16.msra.mxu0 0
        %1646 = vmatpush.bf16.msra.mxu0 0
        %1647 = vmatpush.bf16.msra.mxu0 0
        %1648 = vmatpush.bf16.msra.mxu0 0
        %1649 = vmatpush.bf16.msra.mxu0 0
        %1650 = vmatpush.bf16.msra.mxu0 %v1641
        %1651 = vmatmul.bf16.gmra.mxu0 %v1638
        %v1652 = vpop.f32.mrf.mxu0
        %v1653 = vadd.f32 0.0, %v1652
        %v1654 = vpop.f32.mrf.mxu0
        %1655 = vdwg.mxu0
        %v1657 = vsel %vm944, %v1612, 0
        %v1660 = vsel %vm1080, %v1616, 0
        %1662 = vmatpush.bf16.msra.mxu0 0
        %1663 = vmatpush.bf16.msra.mxu0 0
        %1664 = vmatpush.bf16.msra.mxu0 0
        %1665 = vmatpush.bf16.msra.mxu0 0
        %1666 = vmatpush.bf16.msra.mxu0 0
        %1667 = vmatpush.bf16.msra.mxu0 0
        %1668 = vmatpush.bf16.msra.mxu0 0
        %1669 = vmatpush.bf16.msra.mxu0 %v1660
        %1670 = vmatmul.bf16.gmra.mxu0 %v1657
        %v1671 = vpop.f32.mrf.mxu0
        %v1672 = vadd.f32 0.0, %v1671
        %v1673 = vpop.f32.mrf.mxu0
        %1674 = vdwg.mxu0
        %v1676 = vsel %vm944, %v1613, 0
        %v1679 = vsel %vm1080, %v1617, 0
        %1681 = vmatpush.bf16.msra.mxu0 0
        %1682 = vmatpush.bf16.msra.mxu0 0
        %1683 = vmatpush.bf16.msra.mxu0 0
        %1684 = vmatpush.bf16.msra.mxu0 0
        %1685 = vmatpush.bf16.msra.mxu0 0
        %1686 = vmatpush.bf16.msra.mxu0 0
        %1687 = vmatpush.bf16.msra.mxu0 0
        %1688 = vmatpush.bf16.msra.mxu0 %v1679
        %1689 = vmatmul.bf16.gmra.mxu0 %v1676
        %v1690 = vpop.f32.mrf.mxu0
        %v1691 = vadd.f32 0.0, %v1690
        %v1692 = vpop.f32.mrf.mxu0
        %1693 = vdwg.mxu0
        %v1694 = vsel %vm818, %v1634, 0.0
        %v1695 = vsel %vm818, %v1653, 0.0
        %v1696 = vadd.f32 %v1694, %v1695
        %v1697 = vsel %vm818, %v1672, 0.0
        %v1698 = vadd.f32 %v1696, %v1697
        %v1699 = vsel %vm818, %v1691, 0.0
        %v1700 = vadd.f32 %v1698, %v1699
        %v1701 = vld [vmem:[%s11] sm:$0x1]
        %v1703 = vperm.slane %v1701, 0
        %v1705 = vadd.f32 %v1700, %v1703
        %v1706 = vpack.c.bf16 %v1705, %v1705
        %v1707 = vld [vmem:[#allocation10] sm:$0xf]
        %v1708 = vld [vmem:[#allocation10 + $0x4] sm:$0xf]
        %v1709 = vld [vmem:[#allocation10 + $0x8] sm:$0xf]
        %v1710 = vld [vmem:[#allocation10 + $0xc] sm:$0xf]
        %v1711 = vld [vmem:[%s13] sm:$0x1]
        %v1713 = vperm.slane %v1711, 0
        %v1719 = vunpack.c.l.b16 %v1707
        %v1720 = vunpack.c.l.b16 %v1708
        %v1721 = vunpack.c.l.b16 %v1709
        %v1722 = vunpack.c.l.b16 %v1710
        %v1723 = vpack.c.b16 %v1720, %v1719
        %v1724 = vpack.c.b16 %v1722, %v1721
        %v1728 = vsel %vm818, %v1706, 0
        %1730 = vmatpush.bf16.msra.mxu0 0
        %1731 = vmatpush.bf16.msra.mxu0 0
        %1732 = vmatpush.bf16.msra.mxu0 0
        %1733 = vmatpush.bf16.msra.mxu0 0
        %1734 = vmatpush.bf16.msra.mxu0 0
        %1735 = vmatpush.bf16.msra.mxu0 0
        %1736 = vmatpush.bf16.msra.mxu0 %v1724
        %1737 = vmatpush.bf16.msra.mxu0 %v1723
        %1738 = vmatmul.bf16.gmra.mxu0 %v1728
        %v1739 = vpop.f32.mrf.mxu0
        %v1740 = vadd.f32 %v1713, %v1739
        %v1741 = vpop.f32.mrf.mxu0
        %1742 = vdwg.mxu0
        %v1743 = vmax.f32 %v1740, 0.0
        %v1744 = vpack.c.bf16 %v1743, %v1743
        %v1745 = vld [vmem:[%s14] sm:$0xf]
        %v1746 = vld [vmem:[%s14 + $0x4] sm:$0xf]
        %v1747 = vld [vmem:[%s14 + $0x8] sm:$0xf]
        %v1748 = vld [vmem:[%s14 + $0xc] sm:$0xf]
        %v1749 = vld [vmem:[%s14 + $0x10] sm:$0xf]
        %v1750 = vld [vmem:[%s14 + $0x14] sm:$0xf]
        %v1751 = vld [vmem:[%s14 + $0x18] sm:$0xf]
        %v1752 = vld [vmem:[%s14 + $0x1c] sm:$0xf]
        %v1753 = vld [vmem:[%s15] sm:$0x1]
        %v1755 = vperm.slane %v1753, 0
        %v1765 = vunpack.c.l.b16 %v1745
        %v1766 = vunpack.c.l.b16 %v1746
        %v1767 = vunpack.c.l.b16 %v1747
        %v1768 = vunpack.c.l.b16 %v1748
        %v1769 = vunpack.c.l.b16 %v1749
        %v1770 = vunpack.c.l.b16 %v1750
        %v1771 = vunpack.c.l.b16 %v1751
        %v1772 = vunpack.c.l.b16 %v1752
        %v1773 = vpack.c.b16 %v1766, %v1765
        %v1774 = vpack.c.b16 %v1768, %v1767
        %v1775 = vpack.c.b16 %v1770, %v1769
        %v1776 = vpack.c.b16 %v1772, %v1771
        %vm1781 = vcmask 523264
        %v1783 = vsel %vm1781, %v1744, 0
        %1785 = vmatpush.bf16.msra.mxu0 0
        %1786 = vmatpush.bf16.msra.mxu0 0
        %1787 = vmatpush.bf16.msra.mxu0 0
        %1788 = vmatpush.bf16.msra.mxu0 0
        %1789 = vmatpush.bf16.msra.mxu0 %v1776
        %1790 = vmatpush.bf16.msra.mxu0 %v1775
        %1791 = vmatpush.bf16.msra.mxu0 %v1774
        %1792 = vmatpush.bf16.msra.mxu0 %v1773
        %1793 = vmatmul.bf16.gmra.mxu0 %v1783
        %v1794 = vpop.f32.mrf.mxu0
        %v1795 = vadd.f32 %v1755, %v1794
        %v1796 = vpop.f32.mrf.mxu0
        %1797 = vdwg.mxu0
        %v1798 = vadd.f32 %v1705, %v1795
        %v1799 = vsel %vm818, %v1798, 0.0
        %1800 = vadd.xlane.f32.xlu0 %v1799
        %v1801 = vpop.xlane.xlu0 %1800
        %v1802 = vrcp.pop 32.0
        %v1803 = vmul.f32 32.0, %v1802
        %v1804 = vsub.f32 1.0, %v1803
        %v1805 = vmul.f32 %v1802, %v1804
        %v1806 = vadd.f32 %v1802, %v1805
        %vm1807 = vweird.f32 %v1802
        %v1808 = vsel %vm1807, %v1802, %v1806
        %v1809 = vmul.f32 %v1801, %v1808
        %v1810 = vsub.f32 %v1798, %v1809
        %v1811 = vmul.f32 %v1810, %v1810
        %v1812 = vsel %vm818, %v1811, 0.0
        %1813 = vadd.xlane.f32.xlu0 %v1812
        %v1814 = vpop.xlane.xlu0 %1813
        %v1815 = vmul.f32 %v1814, %v1808
        %v1816 = vadd.f32 %v1815, 1e-05
        %v1817 = vrsqrt.pop %v1816
        %v1818 = vmul.f32 %v1817, %v1816
        %v1819 = vmul.f32 %v1818, %v1817
        %v1820 = vmul.f32 0.5, %v1819
        %v1821 = vsub.f32 1.5, %v1820
        %v1822 = vmul.f32 %v1817, %v1821
        %vm1823 = vweird.f32 %v1816
        %vm1824 = vweird.f32 %v1817
        %vm1825 = vmor %vm1823, %vm1824
        %v1826 = vsel %vm1825, %v1817, %v1822
        %v1827 = vmul.f32 %v1810, %v1826
        %v1828 = vld [vmem:[%s16] sm:$0x1]
        %v1830 = vperm.slane %v1828, 0
        %v1832 = vmul.f32 %v1827, %v1830
        %v1833 = vld [vmem:[%s17] sm:$0x1]
        %v1835 = vperm.slane %v1833, 0
        %v1837 = vadd.f32 %v1832, %v1835
        %1838 = vst.msk [vmem:[%s765] sm:$0xff] %vm818, %v1837
        %1839 = vst.msk [vmem:[%s772] sm:$0xff] %vm944, %v1072
        %1840 = vst.msk [vmem:[%s779] sm:$0xff] %vm944, %v1529
        %s1841 = sand.u32 %s451, 1
        %s1842 = scalar_lea.sflag [#allocation4], %s1841
        %s1843 = sand.u32 %s451, 1
        %s1844 = smul.addr %s1843, 8
        %s1845 = scalar_lea.vmem [#allocation11], %s1844
        %s1846 = sand.u32 %s45, 1
        %s1847 = scalar_lea.sflag [#allocation13], %s1846
        %s1848 = sand.u32 %s477, 1
        %s1849 = smul.addr %s1848, 8
        %s1850 = scalar_lea.vmem [#allocation12], %s1849
        %s1851 = sand.u32 %s45, 1
        %s1852 = scalar_lea.sflag [#allocation13], %s1851
        %s1853 = sand.u32 %s503, 1
        %s1854 = smul.addr %s1853, 8
        %s1855 = scalar_lea.vmem [#allocation14], %s1854
        // Predicated region
        $region113: #{tpu_custom_call.1} parent=91 // pred_check
          %p1856 = pneg %p461
        $region114: #{tpu_custom_call.1} parent=91 // pred_check_branch
          %1858 = sbr.rel (%p1856) target = $region116
        $region115: #{tpu_custom_call.1} parent=91 // pred_region
          %1860 = vsyncadd %s1842, 0
          %s1861 = smul.addr %s45, 8
          %s1862 = scalar_lea.hbm %s18, %s1861
          %s1864 = sshll.u32 %s1845, 4
          %s1865 = int_to_ptr.vmem [resolvable:$true] %s1864
          %s1866 = sshll.u32 %s1862, 4
          %s1867 = int_to_ptr.hbm [resolvable:$true] %s1866
          %1869 = dma.vmem_to_hbm [thread:$0]  %s1865, 128, %s1867, %s1842
        $region116: #{tpu_custom_call.1} parent=91 // pred_fallthru
          _
        // Predicated region
        $region117: #{tpu_custom_call.1} parent=91 // pred_check
          %p1870 = pneg %p487
        $region118: #{tpu_custom_call.1} parent=91 // pred_check_branch
          %1872 = sbr.rel (%p1870) target = $region120
        $region119: #{tpu_custom_call.1} parent=91 // pred_region
          %1874 = vsyncadd %s1847, 0
          %s1875 = smul.addr %s45, 8
          %s1876 = scalar_lea.hbm %s19, %s1875
          %s1878 = sshll.u32 %s1850, 4
          %s1879 = int_to_ptr.vmem [resolvable:$true] %s1878
          %s1880 = sshll.u32 %s1876, 4
          %s1881 = int_to_ptr.hbm [resolvable:$true] %s1880
          %1883 = dma.vmem_to_hbm [thread:$0]  %s1879, 128, %s1881, %s1847
        $region120: #{tpu_custom_call.1} parent=91 // pred_fallthru
          _
        // Predicated region
        $region121: #{tpu_custom_call.1} parent=91 // pred_check
          %p1884 = pneg %p513
        $region122: #{tpu_custom_call.1} parent=91 // pred_check_branch
          %1886 = sbr.rel (%p1884) target = $region124
        $region123: #{tpu_custom_call.1} parent=91 // pred_region
          %1888 = vsyncadd %s1852, 0
          %s1889 = smul.addr %s45, 8
          %s1890 = scalar_lea.hbm %s20, %s1889
          %s1892 = sshll.u32 %s1855, 4
          %s1893 = int_to_ptr.vmem [resolvable:$true] %s1892
          %s1894 = sshll.u32 %s1890, 4
          %s1895 = int_to_ptr.hbm [resolvable:$true] %s1894
          %1897 = dma.vmem_to_hbm [thread:$0]  %s1893, 128, %s1895, %s1852
        $region124: #{tpu_custom_call.1} parent=91 // pred_fallthru
          _
      $region92: #{tpu_custom_call.1} parent=5 // pred_fallthru
        _
      %p1898 = scmp.le.s32.totalorder 2, %s40
      // Predicated region
      $region125: #{tpu_custom_call.1} parent=5 // pred_check
        %p1899 = pneg %p1898
      $region126: #{tpu_custom_call.1} parent=5 // pred_check_branch
        %1901 = sbr.rel (%p1899) target = $region128
      $region127: #{tpu_custom_call.1} parent=5 // pred_region
        %s1902 = ssub.s32 %s40, 2
        // Predicated region
        $region129: #{tpu_custom_call.1} parent=127 // pred_check
          %p1903 = pneg %p467
        $region130: #{tpu_custom_call.1} parent=127 // pred_check_branch
          %1905 = sbr.rel (%p1903) target = $region132
        $region131: #{tpu_custom_call.1} parent=127 // pred_region
          %s1906 = sand.u32 %s452, 1
          %s1907 = scalar_lea.sflag [#allocation4], %s1906
          %s1908 = sand.u32 %s452, 1
          %s1909 = smul.addr %s1908, 8
          %s1910 = scalar_lea.vmem [#allocation11], %s1909
          %1912 = dma.done %s1907, 128
        $region132: #{tpu_custom_call.1} parent=127 // pred_fallthru
          _
        // Predicated region
        $region133: #{tpu_custom_call.1} parent=127 // pred_check
          %p1913 = pneg %p493
        $region134: #{tpu_custom_call.1} parent=127 // pred_check_branch
          %1915 = sbr.rel (%p1913) target = $region136
        $region135: #{tpu_custom_call.1} parent=127 // pred_region
          %s1916 = sand.u32 %s46, 1
          %s1917 = scalar_lea.sflag [#allocation13], %s1916
          %s1918 = sand.u32 %s478, 1
          %s1919 = smul.addr %s1918, 8
          %s1920 = scalar_lea.vmem [#allocation12], %s1919
          %1922 = dma.done %s1917, 128
        $region136: #{tpu_custom_call.1} parent=127 // pred_fallthru
          _
        // Predicated region
        $region137: #{tpu_custom_call.1} parent=127 // pred_check
          %p1923 = pneg %p519
        $region138: #{tpu_custom_call.1} parent=127 // pred_check_branch
          %1925 = sbr.rel (%p1923) target = $region140
        $region139: #{tpu_custom_call.1} parent=127 // pred_region
          %s1926 = sand.u32 %s46, 1
          %s1927 = scalar_lea.sflag [#allocation13], %s1926
          %s1928 = sand.u32 %s504, 1
          %s1929 = smul.addr %s1928, 8
          %s1930 = scalar_lea.vmem [#allocation14], %s1929
          %1932 = dma.done %s1927, 128
        $region140: #{tpu_custom_call.1} parent=127 // pred_fallthru
          _
      $region128: #{tpu_custom_call.1} parent=5 // pred_fallthru
        _
    $region6: #{tpu_custom_call.1} parent=1 // loop_footer
      %s44 = sadd.s32 1, %s40
    $region7: #{tpu_custom_call.1} parent=1 // loop_footer_branch
      %39 = sbr.rel target = $region3
    $region8: #{tpu_custom_call.1} parent=1 // loop_exit
      _
    %1933 = vsyncpa [#allocation3], 1
    %s1934 = scalar_lea.sflag [#allocation3], 1
    %1935 = vsyncpa %s1934, 1
    %1936 = vsyncpa [#allocation6], 1
    %s1937 = scalar_lea.sflag [#allocation6], 1
    %1938 = vsyncpa %s1937, 1
    %1939 = vsyncpa [#allocation9], 1
    %1940 = vsyncpa [#allocation4], 1
    %s1941 = scalar_lea.sflag [#allocation4], 1
    %1942 = vsyncpa %s1941, 1
    %1943 = vsyncpa [#allocation13], 1
    %s1944 = scalar_lea.sflag [#allocation13], 1
    %1945 = vsyncpa %s1944, 1

</llo_original>
